<compile_context>
chip_gen: v7x
topology: tpu7x:2x2x1
jax: 0.10.0
libtpu: 0.0.40
codegen_flags: <defaults>
</compile_context>

<pallas_src>
import functools

import jax
import jax.numpy as jnp
import numpy as np
from jax import lax
from jax.experimental import pallas as pl
from jax.experimental.pallas import tpu as pltpu


def get_padding(kernel_size, stride, dilation):
    if stride == 1:
        return int((kernel_size * dilation - dilation) / 2)
    return 0


# ----------------------------------------------------------------------------
# Fused Pallas kernel (entire residual block per (batch, time-tile) grid step)
# ----------------------------------------------------------------------------
def _leaky(v, neg_slope):
    return jnp.where(v > 0, v, neg_slope * v)


def _mask_valid(v, start_pos, t_valid):
    """Zero columns whose global time position lies outside [0, t_valid).

    Reproduces, inside the fused kernel, the zero-padding the layer-by-layer
    PyTorch computation applies to every conv input at the sequence boundary.
    """
    length = v.shape[-1]
    pos = start_pos + lax.broadcasted_iota(jnp.int32, (1, length), 1)
    ok = jnp.logical_and(pos >= 0, pos < t_valid)
    return jnp.where(ok, v, 0.0)


def _dilated_conv(x_f32, w_ref, b_ref, dilation, out_len, compute_dtype):
    """bias + sum_k W[k] @ x[:, k*d : k*d + out_len]  with f32 accumulation.

    w_ref layout is (K, C_out, C_in): tap index on the leading axis.
    """
    k_taps = w_ref.shape[0]
    x_c = x_f32.astype(compute_dtype)
    acc = None
    for k in range(k_taps):                            # static, unrolled taps
        wk = w_ref[k]                                  # (C_out, C_in)
        xk = x_c[:, k * dilation:k * dilation + out_len]
        part = jnp.dot(wk, xk, preferred_element_type=jnp.float32)
        acc = part if acc is None else acc + part
    return acc + b_ref[...].astype(jnp.float32)


def _resblock1_kernel(x_ref, *refs, layer_cfg, t_tile, t_total, halo,
                      neg_slope, compute_dtype):
    # refs = (w1_0, b1_0, w2_0, b2_0, w1_1, ..., o_ref); all config is static.
    o_ref = refs[-1]
    wb = refs[:-1]
    ti = pl.program_id(1)

    # Residual stream for this tile, carried in f32 inside the kernel.
    # Column c of `cur` is global time position ti*t_tile - h_cur + c.
    cur = x_ref[0, 0].astype(jnp.float32)              # (C, t_tile + 2*halo)
    h_cur = halo
    for j, (dil, _ksz, pad) in enumerate(layer_cfg):
        w1, b1, w2, b2 = wb[4 * j:4 * j + 4]
        start = ti * t_tile - h_cur

        len1 = cur.shape[-1] - 2 * pad
        h = _dilated_conv(_mask_valid(cur, start, t_total), w1, b1, dil,
                          len1, compute_dtype)
        h = _leaky(h, neg_slope)

        len2 = len1 - 2 * pad
        g = _dilated_conv(_mask_valid(h, start + pad, t_total), w2, b2, dil,
                          len2, compute_dtype)
        g = _leaky(g, neg_slope)

        cur = cur[:, 2 * pad:2 * pad + len2] + g       # residual add
        h_cur -= 2 * pad

    o_ref[0] = cur.astype(o_ref.dtype)                 # (C, t_tile)


# ----------------------------------------------------------------------------
# Wrapper
# ----------------------------------------------------------------------------
def _choose_t_tile(c, t, comp_bytes, max_t_tile):
    """128-multiple time tile sized for a conservative (~24 MiB) VMEM budget,
    so the double-buffered working set also fits v7x's 64 MiB VMEM."""
    budget = 24 * 2**20
    per_col = c * (2 * comp_bytes + 10 * 4)            # rough bytes/time column
    cap = max(128, (budget // per_col) // 128 * 128)
    cap = int(min(cap, max_t_tile))
    if t <= cap:
        return t, 1
    return cap, -(-t // cap)


def resblock1_forward_pallas(x, params, *, neg_slope=0.1, compute_dtype=None,
                             max_t_tile=4096):
    """Fused Resblock1 forward over NCL input (single pallas_call)."""
    n, c, t = x.shape
    if compute_dtype is None:
        compute_dtype = x.dtype
    comp_bytes = jnp.dtype(compute_dtype).itemsize

    layer_cfg = []
    wb_args, wb_specs = [], []
    for (w1, b1, d1), (w2, b2, d2) in zip(params["convs1"], params["convs2"]):
        k = int(w1.shape[-1])
        assert d1 == d2 and int(w2.shape[-1]) == k and k % 2 == 1
        assert w1.shape[0] == c and w1.shape[1] == c   # residual needs Cin==Cout
        pad = get_padding(k, 1, d1)
        layer_cfg.append((int(d1), k, pad))
        for w, b in ((w1, b1), (w2, b2)):
            # (C_out, C_in, K) -> (K, C_out, C_in): K on the leading axis.
            wb_args.append(jnp.transpose(w, (2, 0, 1)).astype(compute_dtype))
            wb_specs.append(pl.BlockSpec((k, c, c), lambda b_, t_: (0, 0, 0)))
            wb_args.append(b.reshape(c, 1).astype(jnp.float32))
            wb_specs.append(pl.BlockSpec((c, 1), lambda b_, t_: (0, 0)))
    halo = sum(2 * p for (_, _, p) in layer_cfg)

    t_tile, nt = _choose_t_tile(c, t, comp_bytes, max_t_tile)
    t_round = nt * t_tile
    win = t_tile + 2 * halo

    # Zero-pad (left halo / right halo + tile remainder) and build overlapping
    # per-tile windows host-side; blocked BlockSpecs then give standard
    # double-buffered pipelining over (batch, time_tiles).
    x_pad = jnp.pad(x, ((0, 0), (0, 0), (halo, halo + (t_round - t))))
    if nt == 1:
        x_win = x_pad[:, None]                                   # (N,1,C,win)
    else:
        idx = (jnp.arange(nt) * t_tile)[:, None] + jnp.arange(win)[None, :]
        x_win = jnp.moveaxis(x_pad[:, :, idx], 2, 1)             # (N,nt,C,win)
    x_win = x_win.astype(compute_dtype)

    # Rough VMEM need; raise the scoped limit above the 16/32 MiB defaults for
    # large tiles (capped at v7x's 64 MiB physical VMEM).
    est = (2 * c * win * comp_bytes + 2 * c * t_tile * x.dtype.itemsize
           + sum(2 * kk * c * c * comp_bytes + 2 * c * 4
                 for (_, kk, _) in layer_cfg)
           + 8 * c * win * 4)
    vmem_limit = None
    if est > 16 * 2**20:
        vmem_limit = int(min(max(2 * est, 32 * 2**20), 64 * 2**20))

    kernel = functools.partial(
        _resblock1_kernel, layer_cfg=tuple(layer_cfg), t_tile=t_tile,
        t_total=t, halo=halo, neg_slope=neg_slope, compute_dtype=compute_dtype)

    out = pl.pallas_call(
        kernel,
        out_shape=jax.ShapeDtypeStruct((n, c, t_round), x.dtype),
        grid=(n, nt),
        in_specs=[pl.BlockSpec((1, 1, c, win), lambda b_, t_: (b_, t_, 0, 0))]
                 + wb_specs,
        out_specs=pl.BlockSpec((1, c, t_tile), lambda b_, t_: (b_, 0, t_)),
        compiler_params=pltpu.CompilerParams(
            dimension_semantics=("parallel", "parallel"),
            vmem_limit_bytes=vmem_limit),
    )(x_win, *wb_args)
    return out[:, :, :t] if t_round != t else out


# ----------------------------------------------------------------------------
# Parameters (weight_norm folded into the effective conv weight at init)
# ----------------------------------------------------------------------------
def make_resblock1_params(key, input_size, out_size, kernel_size, dilations,
                          std=0.01):
    if not isinstance(kernel_size, list):
        kernel_size = [kernel_size] * len(dilations)
    params = {"convs1": [], "convs2": [], "dilations": list(dilations)}
    for name in ("convs1", "convs2"):
        for d, k in zip(dilations, kernel_size):
            key, kw, kb = jax.random.split(key, 3)
            # weight_norm with weight.data.normal_(0, std): effective weight
            # at init equals v since g is initialized to ||v||.
            v = std * jax.random.normal(kw, (out_size, input_size, k),
                                        jnp.float32)
            norm = jnp.sqrt(jnp.sum(v * v, axis=(1, 2), keepdims=True))
            w_eff = norm * v / jnp.maximum(norm, 1e-12)
            bound = 1.0 / np.sqrt(input_size * k)
            b = jax.random.uniform(kb, (out_size,), jnp.float32,
                                   minval=-bound, maxval=bound)
            params[name].append((w_eff, b, d))
    return params


# ----------------------------------------------------------------------------
# Pure-JAX layer-by-layer reference (lax.conv) for correctness check
# ----------------------------------------------------------------------------
def _ref_conv1d(x, w, b, dilation):
    k = w.shape[-1]
    p = get_padding(k, 1, dilation)
    y = lax.conv_general_dilated(
        x, w, window_strides=(1,), padding=[(p, p)], rhs_dilation=(dilation,),
        dimension_numbers=("NCH", "OIH", "NCH"))
    return y + b[None, :, None]


def resblock1_forward_ref(x, params, neg_slope=0.1):
    def lrelu(v):
        return jnp.where(v > 0, v, neg_slope * v)
    for (w1, b1, d1), (w2, b2, d2) in zip(params["convs1"], params["convs2"]):
        out1 = lrelu(_ref_conv1d(x, w1, b1, d1))
        out2 = lrelu(_ref_conv1d(out1, w2, b2, d2))
        x = x + out2
    return x


if __name__ == "__main__":
    key = jax.random.PRNGKey(0)
    key, kx, kp, kx2 = jax.random.split(key, 4)

    batch, channels, seq = 2, 4, 16
    kernel_size = 3
    dilations = [1, 3, 5]

    x = jax.random.normal(kx, (batch, channels, seq), jnp.float32)
    params = make_resblock1_params(kp, channels, channels, kernel_size,
                                   dilations)
    ref = jax.block_until_ready(resblock1_forward_ref(x, params))

    # f32 path (exact module semantics)
    out = jax.block_until_ready(resblock1_forward_pallas(x, params))
    np.testing.assert_allclose(np.asarray(out), np.asarray(ref),
                               rtol=1e-5, atol=1e-5)

    # bf16 matmuls / f32 accumulation path
    out_bf16 = jax.block_until_ready(
        resblock1_forward_pallas(x, params, compute_dtype=jnp.bfloat16))
    np.testing.assert_allclose(np.asarray(out_bf16), np.asarray(ref),
                               rtol=5e-2, atol=5e-2)

    # time-tiled path (halo windows + boundary masking + remainder padding)
    seq2 = 320
    x2 = jax.random.normal(kx2, (batch, channels, seq2), jnp.float32)
    ref2 = jax.block_until_ready(resblock1_forward_ref(x2, params))
    out2 = jax.block_until_ready(
        resblock1_forward_pallas(x2, params, max_t_tile=128))
    np.testing.assert_allclose(np.asarray(out2), np.asarray(ref2),
                               rtol=1e-5, atol=1e-5)

    print("KERNEL_OK")
</pallas_src>

<mosaic_0001>
module attributes {stable_mosaic.version = 11 : i64} {
  func.func @_resblock1_kernel(%arg0: i32, %arg1: i32, %arg2: memref<1x1x4x52xf32, #tpu.memory_space<vmem>>, %arg3: memref<3x4x4xf32, #tpu.memory_space<vmem>>, %arg4: memref<4x1xf32, #tpu.memory_space<vmem>>, %arg5: memref<3x4x4xf32, #tpu.memory_space<vmem>>, %arg6: memref<4x1xf32, #tpu.memory_space<vmem>>, %arg7: memref<3x4x4xf32, #tpu.memory_space<vmem>>, %arg8: memref<4x1xf32, #tpu.memory_space<vmem>>, %arg9: memref<3x4x4xf32, #tpu.memory_space<vmem>>, %arg10: memref<4x1xf32, #tpu.memory_space<vmem>>, %arg11: memref<3x4x4xf32, #tpu.memory_space<vmem>>, %arg12: memref<4x1xf32, #tpu.memory_space<vmem>>, %arg13: memref<3x4x4xf32, #tpu.memory_space<vmem>>, %arg14: memref<4x1xf32, #tpu.memory_space<vmem>>, %arg15: memref<1x4x16xf32, #tpu.memory_space<vmem>>) attributes {dimension_semantics = [#tpu.dimension_semantics<parallel>, #tpu.dimension_semantics<parallel>], iteration_bounds = array<i64: 2, 1>, scalar_prefetch = 0 : i64, scratch_operands = 0 : i64, tpu.core_type = #tpu.core_type<tc>, window_params = [{transform_indices = @transform_0, window_bounds = array<i64: 1, 1, 4, 52>}, {pipeline_mode = #tpu.pipeline_mode<synchronous>, transform_indices = @transform_1, window_bounds = array<i64: 3, 4, 4>}, {pipeline_mode = #tpu.pipeline_mode<synchronous>, transform_indices = @transform_2, window_bounds = array<i64: 4, 1>}, {pipeline_mode = #tpu.pipeline_mode<synchronous>, transform_indices = @transform_3, window_bounds = array<i64: 3, 4, 4>}, {pipeline_mode = #tpu.pipeline_mode<synchronous>, transform_indices = @transform_4, window_bounds = array<i64: 4, 1>}, {pipeline_mode = #tpu.pipeline_mode<synchronous>, transform_indices = @transform_5, window_bounds = array<i64: 3, 4, 4>}, {pipeline_mode = #tpu.pipeline_mode<synchronous>, transform_indices = @transform_6, window_bounds = array<i64: 4, 1>}, {pipeline_mode = #tpu.pipeline_mode<synchronous>, transform_indices = @transform_7, window_bounds = array<i64: 3, 4, 4>}, {pipeline_mode = #tpu.pipeline_mode<synchronous>, transform_indices = @transform_8, window_bounds = array<i64: 4, 1>}, {pipeline_mode = #tpu.pipeline_mode<synchronous>, transform_indices = @transform_9, window_bounds = array<i64: 3, 4, 4>}, {pipeline_mode = #tpu.pipeline_mode<synchronous>, transform_indices = @transform_10, window_bounds = array<i64: 4, 1>}, {pipeline_mode = #tpu.pipeline_mode<synchronous>, transform_indices = @transform_11, window_bounds = array<i64: 3, 4, 4>}, {pipeline_mode = #tpu.pipeline_mode<synchronous>, transform_indices = @transform_12, window_bounds = array<i64: 4, 1>}, {transform_indices = @transform_13, window_bounds = array<i64: 1, 4, 16>}]} {
    %c0 = arith.constant 0 : index
    %c0_0 = arith.constant 0 : index
    %c0_1 = arith.constant 0 : index
    %c0_2 = arith.constant 0 : index
    %0 = vector.load %arg2[%c0, %c0_0, %c0_1, %c0_2] : memref<1x1x4x52xf32, #tpu.memory_space<vmem>>, vector<1x1x4x52xf32>
    %1 = vector.shape_cast %0 : vector<1x1x4x52xf32> to vector<4x52xf32>
    %c16_i32 = arith.constant 16 : i32
    %2 = arith.muli %arg1, %c16_i32 : i32
    %c18_i32 = arith.constant 18 : i32
    %3 = arith.subi %2, %c18_i32 : i32
    %4 = tpu.iota {dimensions = array<i32: 1>} : vector<1x52xi32>
    %5 = vector.broadcast %3 : i32 to vector<1x52xi32>
    %6 = arith.addi %5, %4 : vector<1x52xi32>
    %c0_i32 = arith.constant 0 : i32
    %7 = vector.broadcast %c0_i32 : i32 to vector<1x52xi32>
    %8 = arith.cmpi sge, %6, %7 : vector<1x52xi32>
    %c16_i32_3 = arith.constant 16 : i32
    %9 = vector.broadcast %c16_i32_3 : i32 to vector<1x52xi32>
    %10 = arith.cmpi slt, %6, %9 : vector<1x52xi32>
    %11 = arith.andi %8, %10 : vector<1x52xi1>
    %cst = arith.constant 0.000000e+00 : f32
    %12 = vector.shape_cast %11 : vector<1x52xi1> to vector<1x52xi1>
    %13 = vector.broadcast %12 : vector<1x52xi1> to vector<4x52xi1>
    %14 = vector.broadcast %cst : f32 to vector<4x52xf32>
    %15 = arith.select %13, %1, %14 : vector<4x52xi1>, vector<4x52xf32>
    %c0_4 = arith.constant 0 : index
    %c0_5 = arith.constant 0 : index
    %c0_6 = arith.constant 0 : index
    %16 = vector.load %arg3[%c0_4, %c0_5, %c0_6] : memref<3x4x4xf32, #tpu.memory_space<vmem>>, vector<1x4x4xf32>
    %17 = vector.shape_cast %16 : vector<1x4x4xf32> to vector<4x4xf32>
    %18 = vector.extract_strided_slice %15 {offsets = [0, 0], sizes = [4, 50], strides = [1, 1]} : vector<4x52xf32> to vector<4x50xf32>
    %cst_7 = arith.constant dense<0.000000e+00> : vector<4x50xf32>
    %19 = tpu.matmul %17, %18, %cst_7 {dimension_numbers = #tpu.dot_dimension_numbers<[1], [0], [0], [1], [0, 0, 1, 1], [], []>} : vector<4x4xf32>, vector<4x50xf32>, vector<4x50xf32> -> vector<4x50xf32>
    %c1 = arith.constant 1 : index
    %c0_8 = arith.constant 0 : index
    %c0_9 = arith.constant 0 : index
    %20 = vector.load %arg3[%c1, %c0_8, %c0_9] : memref<3x4x4xf32, #tpu.memory_space<vmem>>, vector<1x4x4xf32>
    %21 = vector.shape_cast %20 : vector<1x4x4xf32> to vector<4x4xf32>
    %22 = vector.extract_strided_slice %15 {offsets = [0, 1], sizes = [4, 50], strides = [1, 1]} : vector<4x52xf32> to vector<4x50xf32>
    %cst_10 = arith.constant dense<0.000000e+00> : vector<4x50xf32>
    %23 = tpu.matmul %21, %22, %cst_10 {dimension_numbers = #tpu.dot_dimension_numbers<[1], [0], [0], [1], [0, 0, 1, 1], [], []>} : vector<4x4xf32>, vector<4x50xf32>, vector<4x50xf32> -> vector<4x50xf32>
    %24 = arith.addf %19, %23 : vector<4x50xf32>
    %c2 = arith.constant 2 : index
    %c0_11 = arith.constant 0 : index
    %c0_12 = arith.constant 0 : index
    %25 = vector.load %arg3[%c2, %c0_11, %c0_12] : memref<3x4x4xf32, #tpu.memory_space<vmem>>, vector<1x4x4xf32>
    %26 = vector.shape_cast %25 : vector<1x4x4xf32> to vector<4x4xf32>
    %27 = vector.extract_strided_slice %15 {offsets = [0, 2], sizes = [4, 50], strides = [1, 1]} : vector<4x52xf32> to vector<4x50xf32>
    %cst_13 = arith.constant dense<0.000000e+00> : vector<4x50xf32>
    %28 = tpu.matmul %26, %27, %cst_13 {dimension_numbers = #tpu.dot_dimension_numbers<[1], [0], [0], [1], [0, 0, 1, 1], [], []>} : vector<4x4xf32>, vector<4x50xf32>, vector<4x50xf32> -> vector<4x50xf32>
    %29 = arith.addf %24, %28 : vector<4x50xf32>
    %c0_14 = arith.constant 0 : index
    %c0_15 = arith.constant 0 : index
    %30 = vector.load %arg4[%c0_14, %c0_15] : memref<4x1xf32, #tpu.memory_space<vmem>>, vector<4x1xf32>
    %31 = vector.broadcast %30 : vector<4x1xf32> to vector<4x50xf32>
    %32 = arith.addf %29, %31 : vector<4x50xf32>
    %cst_16 = arith.constant 0.000000e+00 : f32
    %33 = vector.broadcast %cst_16 : f32 to vector<4x50xf32>
    %34 = arith.cmpf ogt, %32, %33 : vector<4x50xf32>
    %cst_17 = arith.constant 1.000000e-01 : f32
    %35 = vector.broadcast %cst_17 : f32 to vector<4x50xf32>
    %36 = arith.mulf %35, %32 : vector<4x50xf32>
    %37 = arith.select %34, %32, %36 : vector<4x50xi1>, vector<4x50xf32>
    %c1_i32 = arith.constant 1 : i32
    %38 = arith.addi %3, %c1_i32 : i32
    %39 = tpu.iota {dimensions = array<i32: 1>} : vector<1x50xi32>
    %40 = vector.broadcast %38 : i32 to vector<1x50xi32>
    %41 = arith.addi %40, %39 : vector<1x50xi32>
    %c0_i32_18 = arith.constant 0 : i32
    %42 = vector.broadcast %c0_i32_18 : i32 to vector<1x50xi32>
    %43 = arith.cmpi sge, %41, %42 : vector<1x50xi32>
    %c16_i32_19 = arith.constant 16 : i32
    %44 = vector.broadcast %c16_i32_19 : i32 to vector<1x50xi32>
    %45 = arith.cmpi slt, %41, %44 : vector<1x50xi32>
    %46 = arith.andi %43, %45 : vector<1x50xi1>
    %cst_20 = arith.constant 0.000000e+00 : f32
    %47 = vector.shape_cast %46 : vector<1x50xi1> to vector<1x50xi1>
    %48 = vector.broadcast %47 : vector<1x50xi1> to vector<4x50xi1>
    %49 = vector.broadcast %cst_20 : f32 to vector<4x50xf32>
    %50 = arith.select %48, %37, %49 : vector<4x50xi1>, vector<4x50xf32>
    %c0_21 = arith.constant 0 : index
    %c0_22 = arith.constant 0 : index
    %c0_23 = arith.constant 0 : index
    %51 = vector.load %arg5[%c0_21, %c0_22, %c0_23] : memref<3x4x4xf32, #tpu.memory_space<vmem>>, vector<1x4x4xf32>
    %52 = vector.shape_cast %51 : vector<1x4x4xf32> to vector<4x4xf32>
    %53 = vector.extract_strided_slice %50 {offsets = [0, 0], sizes = [4, 48], strides = [1, 1]} : vector<4x50xf32> to vector<4x48xf32>
    %cst_24 = arith.constant dense<0.000000e+00> : vector<4x48xf32>
    %54 = tpu.matmul %52, %53, %cst_24 {dimension_numbers = #tpu.dot_dimension_numbers<[1], [0], [0], [1], [0, 0, 1, 1], [], []>} : vector<4x4xf32>, vector<4x48xf32>, vector<4x48xf32> -> vector<4x48xf32>
    %c1_25 = arith.constant 1 : index
    %c0_26 = arith.constant 0 : index
    %c0_27 = arith.constant 0 : index
    %55 = vector.load %arg5[%c1_25, %c0_26, %c0_27] : memref<3x4x4xf32, #tpu.memory_space<vmem>>, vector<1x4x4xf32>
    %56 = vector.shape_cast %55 : vector<1x4x4xf32> to vector<4x4xf32>
    %57 = vector.extract_strided_slice %50 {offsets = [0, 1], sizes = [4, 48], strides = [1, 1]} : vector<4x50xf32> to vector<4x48xf32>
    %cst_28 = arith.constant dense<0.000000e+00> : vector<4x48xf32>
    %58 = tpu.matmul %56, %57, %cst_28 {dimension_numbers = #tpu.dot_dimension_numbers<[1], [0], [0], [1], [0, 0, 1, 1], [], []>} : vector<4x4xf32>, vector<4x48xf32>, vector<4x48xf32> -> vector<4x48xf32>
    %59 = arith.addf %54, %58 : vector<4x48xf32>
    %c2_29 = arith.constant 2 : index
    %c0_30 = arith.constant 0 : index
    %c0_31 = arith.constant 0 : index
    %60 = vector.load %arg5[%c2_29, %c0_30, %c0_31] : memref<3x4x4xf32, #tpu.memory_space<vmem>>, vector<1x4x4xf32>
    %61 = vector.shape_cast %60 : vector<1x4x4xf32> to vector<4x4xf32>
    %62 = vector.extract_strided_slice %50 {offsets = [0, 2], sizes = [4, 48], strides = [1, 1]} : vector<4x50xf32> to vector<4x48xf32>
    %cst_32 = arith.constant dense<0.000000e+00> : vector<4x48xf32>
    %63 = tpu.matmul %61, %62, %cst_32 {dimension_numbers = #tpu.dot_dimension_numbers<[1], [0], [0], [1], [0, 0, 1, 1], [], []>} : vector<4x4xf32>, vector<4x48xf32>, vector<4x48xf32> -> vector<4x48xf32>
    %64 = arith.addf %59, %63 : vector<4x48xf32>
    %c0_33 = arith.constant 0 : index
    %c0_34 = arith.constant 0 : index
    %65 = vector.load %arg6[%c0_33, %c0_34] : memref<4x1xf32, #tpu.memory_space<vmem>>, vector<4x1xf32>
    %66 = vector.broadcast %65 : vector<4x1xf32> to vector<4x48xf32>
    %67 = arith.addf %64, %66 : vector<4x48xf32>
    %cst_35 = arith.constant 0.000000e+00 : f32
    %68 = vector.broadcast %cst_35 : f32 to vector<4x48xf32>
    %69 = arith.cmpf ogt, %67, %68 : vector<4x48xf32>
    %cst_36 = arith.constant 1.000000e-01 : f32
    %70 = vector.broadcast %cst_36 : f32 to vector<4x48xf32>
    %71 = arith.mulf %70, %67 : vector<4x48xf32>
    %72 = arith.select %69, %67, %71 : vector<4x48xi1>, vector<4x48xf32>
    %73 = vector.extract_strided_slice %1 {offsets = [0, 2], sizes = [4, 48], strides = [1, 1]} : vector<4x52xf32> to vector<4x48xf32>
    %74 = arith.addf %73, %72 : vector<4x48xf32>
    %c16_i32_37 = arith.constant 16 : i32
    %75 = arith.muli %arg1, %c16_i32_37 : i32
    %c16_i32_38 = arith.constant 16 : i32
    %76 = arith.subi %75, %c16_i32_38 : i32
    %77 = tpu.iota {dimensions = array<i32: 1>} : vector<1x48xi32>
    %78 = vector.broadcast %76 : i32 to vector<1x48xi32>
    %79 = arith.addi %78, %77 : vector<1x48xi32>
    %c0_i32_39 = arith.constant 0 : i32
    %80 = vector.broadcast %c0_i32_39 : i32 to vector<1x48xi32>
    %81 = arith.cmpi sge, %79, %80 : vector<1x48xi32>
    %c16_i32_40 = arith.constant 16 : i32
    %82 = vector.broadcast %c16_i32_40 : i32 to vector<1x48xi32>
    %83 = arith.cmpi slt, %79, %82 : vector<1x48xi32>
    %84 = arith.andi %81, %83 : vector<1x48xi1>
    %cst_41 = arith.constant 0.000000e+00 : f32
    %85 = vector.shape_cast %84 : vector<1x48xi1> to vector<1x48xi1>
    %86 = vector.broadcast %85 : vector<1x48xi1> to vector<4x48xi1>
    %87 = vector.broadcast %cst_41 : f32 to vector<4x48xf32>
    %88 = arith.select %86, %74, %87 : vector<4x48xi1>, vector<4x48xf32>
    %c0_42 = arith.constant 0 : index
    %c0_43 = arith.constant 0 : index
    %c0_44 = arith.constant 0 : index
    %89 = vector.load %arg7[%c0_42, %c0_43, %c0_44] : memref<3x4x4xf32, #tpu.memory_space<vmem>>, vector<1x4x4xf32>
    %90 = vector.shape_cast %89 : vector<1x4x4xf32> to vector<4x4xf32>
    %91 = vector.extract_strided_slice %88 {offsets = [0, 0], sizes = [4, 42], strides = [1, 1]} : vector<4x48xf32> to vector<4x42xf32>
    %cst_45 = arith.constant dense<0.000000e+00> : vector<4x42xf32>
    %92 = tpu.matmul %90, %91, %cst_45 {dimension_numbers = #tpu.dot_dimension_numbers<[1], [0], [0], [1], [0, 0, 1, 1], [], []>} : vector<4x4xf32>, vector<4x42xf32>, vector<4x42xf32> -> vector<4x42xf32>
    %c1_46 = arith.constant 1 : index
    %c0_47 = arith.constant 0 : index
    %c0_48 = arith.constant 0 : index
    %93 = vector.load %arg7[%c1_46, %c0_47, %c0_48] : memref<3x4x4xf32, #tpu.memory_space<vmem>>, vector<1x4x4xf32>
    %94 = vector.shape_cast %93 : vector<1x4x4xf32> to vector<4x4xf32>
    %95 = vector.extract_strided_slice %88 {offsets = [0, 3], sizes = [4, 42], strides = [1, 1]} : vector<4x48xf32> to vector<4x42xf32>
    %cst_49 = arith.constant dense<0.000000e+00> : vector<4x42xf32>
    %96 = tpu.matmul %94, %95, %cst_49 {dimension_numbers = #tpu.dot_dimension_numbers<[1], [0], [0], [1], [0, 0, 1, 1], [], []>} : vector<4x4xf32>, vector<4x42xf32>, vector<4x42xf32> -> vector<4x42xf32>
    %97 = arith.addf %92, %96 : vector<4x42xf32>
    %c2_50 = arith.constant 2 : index
    %c0_51 = arith.constant 0 : index
    %c0_52 = arith.constant 0 : index
    %98 = vector.load %arg7[%c2_50, %c0_51, %c0_52] : memref<3x4x4xf32, #tpu.memory_space<vmem>>, vector<1x4x4xf32>
    %99 = vector.shape_cast %98 : vector<1x4x4xf32> to vector<4x4xf32>
    %100 = vector.extract_strided_slice %88 {offsets = [0, 6], sizes = [4, 42], strides = [1, 1]} : vector<4x48xf32> to vector<4x42xf32>
    %cst_53 = arith.constant dense<0.000000e+00> : vector<4x42xf32>
    %101 = tpu.matmul %99, %100, %cst_53 {dimension_numbers = #tpu.dot_dimension_numbers<[1], [0], [0], [1], [0, 0, 1, 1], [], []>} : vector<4x4xf32>, vector<4x42xf32>, vector<4x42xf32> -> vector<4x42xf32>
    %102 = arith.addf %97, %101 : vector<4x42xf32>
    %c0_54 = arith.constant 0 : index
    %c0_55 = arith.constant 0 : index
    %103 = vector.load %arg8[%c0_54, %c0_55] : memref<4x1xf32, #tpu.memory_space<vmem>>, vector<4x1xf32>
    %104 = vector.broadcast %103 : vector<4x1xf32> to vector<4x42xf32>
    %105 = arith.addf %102, %104 : vector<4x42xf32>
    %cst_56 = arith.constant 0.000000e+00 : f32
    %106 = vector.broadcast %cst_56 : f32 to vector<4x42xf32>
    %107 = arith.cmpf ogt, %105, %106 : vector<4x42xf32>
    %cst_57 = arith.constant 1.000000e-01 : f32
    %108 = vector.broadcast %cst_57 : f32 to vector<4x42xf32>
    %109 = arith.mulf %108, %105 : vector<4x42xf32>
    %110 = arith.select %107, %105, %109 : vector<4x42xi1>, vector<4x42xf32>
    %c3_i32 = arith.constant 3 : i32
    %111 = arith.addi %76, %c3_i32 : i32
    %112 = tpu.iota {dimensions = array<i32: 1>} : vector<1x42xi32>
    %113 = vector.broadcast %111 : i32 to vector<1x42xi32>
    %114 = arith.addi %113, %112 : vector<1x42xi32>
    %c0_i32_58 = arith.constant 0 : i32
    %115 = vector.broadcast %c0_i32_58 : i32 to vector<1x42xi32>
    %116 = arith.cmpi sge, %114, %115 : vector<1x42xi32>
    %c16_i32_59 = arith.constant 16 : i32
    %117 = vector.broadcast %c16_i32_59 : i32 to vector<1x42xi32>
    %118 = arith.cmpi slt, %114, %117 : vector<1x42xi32>
    %119 = arith.andi %116, %118 : vector<1x42xi1>
    %cst_60 = arith.constant 0.000000e+00 : f32
    %120 = vector.shape_cast %119 : vector<1x42xi1> to vector<1x42xi1>
    %121 = vector.broadcast %120 : vector<1x42xi1> to vector<4x42xi1>
    %122 = vector.broadcast %cst_60 : f32 to vector<4x42xf32>
    %123 = arith.select %121, %110, %122 : vector<4x42xi1>, vector<4x42xf32>
    %c0_61 = arith.constant 0 : index
    %c0_62 = arith.constant 0 : index
    %c0_63 = arith.constant 0 : index
    %124 = vector.load %arg9[%c0_61, %c0_62, %c0_63] : memref<3x4x4xf32, #tpu.memory_space<vmem>>, vector<1x4x4xf32>
    %125 = vector.shape_cast %124 : vector<1x4x4xf32> to vector<4x4xf32>
    %126 = vector.extract_strided_slice %123 {offsets = [0, 0], sizes = [4, 36], strides = [1, 1]} : vector<4x42xf32> to vector<4x36xf32>
    %cst_64 = arith.constant dense<0.000000e+00> : vector<4x36xf32>
    %127 = tpu.matmul %125, %126, %cst_64 {dimension_numbers = #tpu.dot_dimension_numbers<[1], [0], [0], [1], [0, 0, 1, 1], [], []>} : vector<4x4xf32>, vector<4x36xf32>, vector<4x36xf32> -> vector<4x36xf32>
    %c1_65 = arith.constant 1 : index
    %c0_66 = arith.constant 0 : index
    %c0_67 = arith.constant 0 : index
    %128 = vector.load %arg9[%c1_65, %c0_66, %c0_67] : memref<3x4x4xf32, #tpu.memory_space<vmem>>, vector<1x4x4xf32>
    %129 = vector.shape_cast %128 : vector<1x4x4xf32> to vector<4x4xf32>
    %130 = vector.extract_strided_slice %123 {offsets = [0, 3], sizes = [4, 36], strides = [1, 1]} : vector<4x42xf32> to vector<4x36xf32>
    %cst_68 = arith.constant dense<0.000000e+00> : vector<4x36xf32>
    %131 = tpu.matmul %129, %130, %cst_68 {dimension_numbers = #tpu.dot_dimension_numbers<[1], [0], [0], [1], [0, 0, 1, 1], [], []>} : vector<4x4xf32>, vector<4x36xf32>, vector<4x36xf32> -> vector<4x36xf32>
    %132 = arith.addf %127, %131 : vector<4x36xf32>
    %c2_69 = arith.constant 2 : index
    %c0_70 = arith.constant 0 : index
    %c0_71 = arith.constant 0 : index
    %133 = vector.load %arg9[%c2_69, %c0_70, %c0_71] : memref<3x4x4xf32, #tpu.memory_space<vmem>>, vector<1x4x4xf32>
    %134 = vector.shape_cast %133 : vector<1x4x4xf32> to vector<4x4xf32>
    %135 = vector.extract_strided_slice %123 {offsets = [0, 6], sizes = [4, 36], strides = [1, 1]} : vector<4x42xf32> to vector<4x36xf32>
    %cst_72 = arith.constant dense<0.000000e+00> : vector<4x36xf32>
    %136 = tpu.matmul %134, %135, %cst_72 {dimension_numbers = #tpu.dot_dimension_numbers<[1], [0], [0], [1], [0, 0, 1, 1], [], []>} : vector<4x4xf32>, vector<4x36xf32>, vector<4x36xf32> -> vector<4x36xf32>
    %137 = arith.addf %132, %136 : vector<4x36xf32>
    %c0_73 = arith.constant 0 : index
    %c0_74 = arith.constant 0 : index
    %138 = vector.load %arg10[%c0_73, %c0_74] : memref<4x1xf32, #tpu.memory_space<vmem>>, vector<4x1xf32>
    %139 = vector.broadcast %138 : vector<4x1xf32> to vector<4x36xf32>
    %140 = arith.addf %137, %139 : vector<4x36xf32>
    %cst_75 = arith.constant 0.000000e+00 : f32
    %141 = vector.broadcast %cst_75 : f32 to vector<4x36xf32>
    %142 = arith.cmpf ogt, %140, %141 : vector<4x36xf32>
    %cst_76 = arith.constant 1.000000e-01 : f32
    %143 = vector.broadcast %cst_76 : f32 to vector<4x36xf32>
    %144 = arith.mulf %143, %140 : vector<4x36xf32>
    %145 = arith.select %142, %140, %144 : vector<4x36xi1>, vector<4x36xf32>
    %146 = vector.extract_strided_slice %74 {offsets = [0, 6], sizes = [4, 36], strides = [1, 1]} : vector<4x48xf32> to vector<4x36xf32>
    %147 = arith.addf %146, %145 : vector<4x36xf32>
    %c16_i32_77 = arith.constant 16 : i32
    %148 = arith.muli %arg1, %c16_i32_77 : i32
    %c10_i32 = arith.constant 10 : i32
    %149 = arith.subi %148, %c10_i32 : i32
    %150 = tpu.iota {dimensions = array<i32: 1>} : vector<1x36xi32>
    %151 = vector.broadcast %149 : i32 to vector<1x36xi32>
    %152 = arith.addi %151, %150 : vector<1x36xi32>
    %c0_i32_78 = arith.constant 0 : i32
    %153 = vector.broadcast %c0_i32_78 : i32 to vector<1x36xi32>
    %154 = arith.cmpi sge, %152, %153 : vector<1x36xi32>
    %c16_i32_79 = arith.constant 16 : i32
    %155 = vector.broadcast %c16_i32_79 : i32 to vector<1x36xi32>
    %156 = arith.cmpi slt, %152, %155 : vector<1x36xi32>
    %157 = arith.andi %154, %156 : vector<1x36xi1>
    %cst_80 = arith.constant 0.000000e+00 : f32
    %158 = vector.shape_cast %157 : vector<1x36xi1> to vector<1x36xi1>
    %159 = vector.broadcast %158 : vector<1x36xi1> to vector<4x36xi1>
    %160 = vector.broadcast %cst_80 : f32 to vector<4x36xf32>
    %161 = arith.select %159, %147, %160 : vector<4x36xi1>, vector<4x36xf32>
    %c0_81 = arith.constant 0 : index
    %c0_82 = arith.constant 0 : index
    %c0_83 = arith.constant 0 : index
    %162 = vector.load %arg11[%c0_81, %c0_82, %c0_83] : memref<3x4x4xf32, #tpu.memory_space<vmem>>, vector<1x4x4xf32>
    %163 = vector.shape_cast %162 : vector<1x4x4xf32> to vector<4x4xf32>
    %164 = vector.extract_strided_slice %161 {offsets = [0, 0], sizes = [4, 26], strides = [1, 1]} : vector<4x36xf32> to vector<4x26xf32>
    %cst_84 = arith.constant dense<0.000000e+00> : vector<4x26xf32>
    %165 = tpu.matmul %163, %164, %cst_84 {dimension_numbers = #tpu.dot_dimension_numbers<[1], [0], [0], [1], [0, 0, 1, 1], [], []>} : vector<4x4xf32>, vector<4x26xf32>, vector<4x26xf32> -> vector<4x26xf32>
    %c1_85 = arith.constant 1 : index
    %c0_86 = arith.constant 0 : index
    %c0_87 = arith.constant 0 : index
    %166 = vector.load %arg11[%c1_85, %c0_86, %c0_87] : memref<3x4x4xf32, #tpu.memory_space<vmem>>, vector<1x4x4xf32>
    %167 = vector.shape_cast %166 : vector<1x4x4xf32> to vector<4x4xf32>
    %168 = vector.extract_strided_slice %161 {offsets = [0, 5], sizes = [4, 26], strides = [1, 1]} : vector<4x36xf32> to vector<4x26xf32>
    %cst_88 = arith.constant dense<0.000000e+00> : vector<4x26xf32>
    %169 = tpu.matmul %167, %168, %cst_88 {dimension_numbers = #tpu.dot_dimension_numbers<[1], [0], [0], [1], [0, 0, 1, 1], [], []>} : vector<4x4xf32>, vector<4x26xf32>, vector<4x26xf32> -> vector<4x26xf32>
    %170 = arith.addf %165, %169 : vector<4x26xf32>
    %c2_89 = arith.constant 2 : index
    %c0_90 = arith.constant 0 : index
    %c0_91 = arith.constant 0 : index
    %171 = vector.load %arg11[%c2_89, %c0_90, %c0_91] : memref<3x4x4xf32, #tpu.memory_space<vmem>>, vector<1x4x4xf32>
    %172 = vector.shape_cast %171 : vector<1x4x4xf32> to vector<4x4xf32>
    %173 = vector.extract_strided_slice %161 {offsets = [0, 10], sizes = [4, 26], strides = [1, 1]} : vector<4x36xf32> to vector<4x26xf32>
    %cst_92 = arith.constant dense<0.000000e+00> : vector<4x26xf32>
    %174 = tpu.matmul %172, %173, %cst_92 {dimension_numbers = #tpu.dot_dimension_numbers<[1], [0], [0], [1], [0, 0, 1, 1], [], []>} : vector<4x4xf32>, vector<4x26xf32>, vector<4x26xf32> -> vector<4x26xf32>
    %175 = arith.addf %170, %174 : vector<4x26xf32>
    %c0_93 = arith.constant 0 : index
    %c0_94 = arith.constant 0 : index
    %176 = vector.load %arg12[%c0_93, %c0_94] : memref<4x1xf32, #tpu.memory_space<vmem>>, vector<4x1xf32>
    %177 = vector.broadcast %176 : vector<4x1xf32> to vector<4x26xf32>
    %178 = arith.addf %175, %177 : vector<4x26xf32>
    %cst_95 = arith.constant 0.000000e+00 : f32
    %179 = vector.broadcast %cst_95 : f32 to vector<4x26xf32>
    %180 = arith.cmpf ogt, %178, %179 : vector<4x26xf32>
    %cst_96 = arith.constant 1.000000e-01 : f32
    %181 = vector.broadcast %cst_96 : f32 to vector<4x26xf32>
    %182 = arith.mulf %181, %178 : vector<4x26xf32>
    %183 = arith.select %180, %178, %182 : vector<4x26xi1>, vector<4x26xf32>
    %c5_i32 = arith.constant 5 : i32
    %184 = arith.addi %149, %c5_i32 : i32
    %185 = tpu.iota {dimensions = array<i32: 1>} : vector<1x26xi32>
    %186 = vector.broadcast %184 : i32 to vector<1x26xi32>
    %187 = arith.addi %186, %185 : vector<1x26xi32>
    %c0_i32_97 = arith.constant 0 : i32
    %188 = vector.broadcast %c0_i32_97 : i32 to vector<1x26xi32>
    %189 = arith.cmpi sge, %187, %188 : vector<1x26xi32>
    %c16_i32_98 = arith.constant 16 : i32
    %190 = vector.broadcast %c16_i32_98 : i32 to vector<1x26xi32>
    %191 = arith.cmpi slt, %187, %190 : vector<1x26xi32>
    %192 = arith.andi %189, %191 : vector<1x26xi1>
    %cst_99 = arith.constant 0.000000e+00 : f32
    %193 = vector.shape_cast %192 : vector<1x26xi1> to vector<1x26xi1>
    %194 = vector.broadcast %193 : vector<1x26xi1> to vector<4x26xi1>
    %195 = vector.broadcast %cst_99 : f32 to vector<4x26xf32>
    %196 = arith.select %194, %183, %195 : vector<4x26xi1>, vector<4x26xf32>
    %c0_100 = arith.constant 0 : index
    %c0_101 = arith.constant 0 : index
    %c0_102 = arith.constant 0 : index
    %197 = vector.load %arg13[%c0_100, %c0_101, %c0_102] : memref<3x4x4xf32, #tpu.memory_space<vmem>>, vector<1x4x4xf32>
    %198 = vector.shape_cast %197 : vector<1x4x4xf32> to vector<4x4xf32>
    %199 = vector.extract_strided_slice %196 {offsets = [0, 0], sizes = [4, 16], strides = [1, 1]} : vector<4x26xf32> to vector<4x16xf32>
    %cst_103 = arith.constant dense<0.000000e+00> : vector<4x16xf32>
    %200 = tpu.matmul %198, %199, %cst_103 {dimension_numbers = #tpu.dot_dimension_numbers<[1], [0], [0], [1], [0, 0, 1, 1], [], []>} : vector<4x4xf32>, vector<4x16xf32>, vector<4x16xf32> -> vector<4x16xf32>
    %c1_104 = arith.constant 1 : index
    %c0_105 = arith.constant 0 : index
    %c0_106 = arith.constant 0 : index
    %201 = vector.load %arg13[%c1_104, %c0_105, %c0_106] : memref<3x4x4xf32, #tpu.memory_space<vmem>>, vector<1x4x4xf32>
    %202 = vector.shape_cast %201 : vector<1x4x4xf32> to vector<4x4xf32>
    %203 = vector.extract_strided_slice %196 {offsets = [0, 5], sizes = [4, 16], strides = [1, 1]} : vector<4x26xf32> to vector<4x16xf32>
    %cst_107 = arith.constant dense<0.000000e+00> : vector<4x16xf32>
    %204 = tpu.matmul %202, %203, %cst_107 {dimension_numbers = #tpu.dot_dimension_numbers<[1], [0], [0], [1], [0, 0, 1, 1], [], []>} : vector<4x4xf32>, vector<4x16xf32>, vector<4x16xf32> -> vector<4x16xf32>
    %205 = arith.addf %200, %204 : vector<4x16xf32>
    %c2_108 = arith.constant 2 : index
    %c0_109 = arith.constant 0 : index
    %c0_110 = arith.constant 0 : index
    %206 = vector.load %arg13[%c2_108, %c0_109, %c0_110] : memref<3x4x4xf32, #tpu.memory_space<vmem>>, vector<1x4x4xf32>
    %207 = vector.shape_cast %206 : vector<1x4x4xf32> to vector<4x4xf32>
    %208 = vector.extract_strided_slice %196 {offsets = [0, 10], sizes = [4, 16], strides = [1, 1]} : vector<4x26xf32> to vector<4x16xf32>
    %cst_111 = arith.constant dense<0.000000e+00> : vector<4x16xf32>
    %209 = tpu.matmul %207, %208, %cst_111 {dimension_numbers = #tpu.dot_dimension_numbers<[1], [0], [0], [1], [0, 0, 1, 1], [], []>} : vector<4x4xf32>, vector<4x16xf32>, vector<4x16xf32> -> vector<4x16xf32>
    %210 = arith.addf %205, %209 : vector<4x16xf32>
    %c0_112 = arith.constant 0 : index
    %c0_113 = arith.constant 0 : index
    %211 = vector.load %arg14[%c0_112, %c0_113] : memref<4x1xf32, #tpu.memory_space<vmem>>, vector<4x1xf32>
    %212 = vector.broadcast %211 : vector<4x1xf32> to vector<4x16xf32>
    %213 = arith.addf %210, %212 : vector<4x16xf32>
    %cst_114 = arith.constant 0.000000e+00 : f32
    %214 = vector.broadcast %cst_114 : f32 to vector<4x16xf32>
    %215 = arith.cmpf ogt, %213, %214 : vector<4x16xf32>
    %cst_115 = arith.constant 1.000000e-01 : f32
    %216 = vector.broadcast %cst_115 : f32 to vector<4x16xf32>
    %217 = arith.mulf %216, %213 : vector<4x16xf32>
    %218 = arith.select %215, %213, %217 : vector<4x16xi1>, vector<4x16xf32>
    %219 = vector.extract_strided_slice %147 {offsets = [0, 10], sizes = [4, 16], strides = [1, 1]} : vector<4x36xf32> to vector<4x16xf32>
    %220 = arith.addf %219, %218 : vector<4x16xf32>
    %c0_116 = arith.constant 0 : index
    %c0_117 = arith.constant 0 : index
    %c0_118 = arith.constant 0 : index
    %221 = vector.load %arg15[%c0_116, %c0_117, %c0_118] : memref<1x4x16xf32, #tpu.memory_space<vmem>>, vector<1x4x16xf32>
    %222 = vector.shape_cast %221 : vector<1x4x16xf32> to vector<4x16xf32>
    %223 = vector.shape_cast %220 : vector<4x16xf32> to vector<1x4x16xf32>
    tpu.vector_store %arg15[%c0_116, %c0_117, %c0_118], %223 {strides = array<i32>} : memref<1x4x16xf32, #tpu.memory_space<vmem>>, vector<1x4x16xf32>,
    return
  }
  func.func @transform_0(%arg0: i32, %arg1: i32) -> (i32, i32, i32, i32) {
    %c0_i32 = arith.constant 0 : i32
    %c0_i32_0 = arith.constant 0 : i32
    %c0_i32_1 = arith.constant 0 : i32
    return %arg0, %arg1, %c0_i32, %c0_i32_0 : i32, i32, i32, i32
  }
  func.func @transform_1(%arg0: i32, %arg1: i32) -> (i32, i32, i32) {
    %c0_i32 = arith.constant 0 : i32
    %c0_i32_0 = arith.constant 0 : i32
    %c0_i32_1 = arith.constant 0 : i32
    %c0_i32_2 = arith.constant 0 : i32
    return %c0_i32, %c0_i32_0, %c0_i32_1 : i32, i32, i32
  }
  func.func @transform_2(%arg0: i32, %arg1: i32) -> (i32, i32) {
    %c0_i32 = arith.constant 0 : i32
    %c0_i32_0 = arith.constant 0 : i32
    %c0_i32_1 = arith.constant 0 : i32
    return %c0_i32, %c0_i32_0 : i32, i32
  }
  func.func @transform_3(%arg0: i32, %arg1: i32) -> (i32, i32, i32) {
    %c0_i32 = arith.constant 0 : i32
    %c0_i32_0 = arith.constant 0 : i32
    %c0_i32_1 = arith.constant 0 : i32
    %c0_i32_2 = arith.constant 0 : i32
    return %c0_i32, %c0_i32_0, %c0_i32_1 : i32, i32, i32
  }
  func.func @transform_4(%arg0: i32, %arg1: i32) -> (i32, i32) {
    %c0_i32 = arith.constant 0 : i32
    %c0_i32_0 = arith.constant 0 : i32
    %c0_i32_1 = arith.constant 0 : i32
    return %c0_i32, %c0_i32_0 : i32, i32
  }
  func.func @transform_5(%arg0: i32, %arg1: i32) -> (i32, i32, i32) {
    %c0_i32 = arith.constant 0 : i32
    %c0_i32_0 = arith.constant 0 : i32
    %c0_i32_1 = arith.constant 0 : i32
    %c0_i32_2 = arith.constant 0 : i32
    return %c0_i32, %c0_i32_0, %c0_i32_1 : i32, i32, i32
  }
  func.func @transform_6(%arg0: i32, %arg1: i32) -> (i32, i32) {
    %c0_i32 = arith.constant 0 : i32
    %c0_i32_0 = arith.constant 0 : i32
    %c0_i32_1 = arith.constant 0 : i32
    return %c0_i32, %c0_i32_0 : i32, i32
  }
  func.func @transform_7(%arg0: i32, %arg1: i32) -> (i32, i32, i32) {
    %c0_i32 = arith.constant 0 : i32
    %c0_i32_0 = arith.constant 0 : i32
    %c0_i32_1 = arith.constant 0 : i32
    %c0_i32_2 = arith.constant 0 : i32
    return %c0_i32, %c0_i32_0, %c0_i32_1 : i32, i32, i32
  }
  func.func @transform_8(%arg0: i32, %arg1: i32) -> (i32, i32) {
    %c0_i32 = arith.constant 0 : i32
    %c0_i32_0 = arith.constant 0 : i32
    %c0_i32_1 = arith.constant 0 : i32
    return %c0_i32, %c0_i32_0 : i32, i32
  }
  func.func @transform_9(%arg0: i32, %arg1: i32) -> (i32, i32, i32) {
    %c0_i32 = arith.constant 0 : i32
    %c0_i32_0 = arith.constant 0 : i32
    %c0_i32_1 = arith.constant 0 : i32
    %c0_i32_2 = arith.constant 0 : i32
    return %c0_i32, %c0_i32_0, %c0_i32_1 : i32, i32, i32
  }
  func.func @transform_10(%arg0: i32, %arg1: i32) -> (i32, i32) {
    %c0_i32 = arith.constant 0 : i32
    %c0_i32_0 = arith.constant 0 : i32
    %c0_i32_1 = arith.constant 0 : i32
    return %c0_i32, %c0_i32_0 : i32, i32
  }
  func.func @transform_11(%arg0: i32, %arg1: i32) -> (i32, i32, i32) {
    %c0_i32 = arith.constant 0 : i32
    %c0_i32_0 = arith.constant 0 : i32
    %c0_i32_1 = arith.constant 0 : i32
    %c0_i32_2 = arith.constant 0 : i32
    return %c0_i32, %c0_i32_0, %c0_i32_1 : i32, i32, i32
  }
  func.func @transform_12(%arg0: i32, %arg1: i32) -> (i32, i32) {
    %c0_i32 = arith.constant 0 : i32
    %c0_i32_0 = arith.constant 0 : i32
    %c0_i32_1 = arith.constant 0 : i32
    return %c0_i32, %c0_i32_0 : i32, i32
  }
  func.func @transform_13(%arg0: i32, %arg1: i32) -> (i32, i32, i32) {
    %c0_i32 = arith.constant 0 : i32
    %c0_i32_0 = arith.constant 0 : i32
    return %arg0, %c0_i32, %arg1 : i32, i32, i32
  }
}

</mosaic_0001>

<llo_original>
// kernel: tpu_custom_call.1
$region0: #{tpu_custom_call.1}
  #allocation0 [shape = 'u32[]', space=smem, size = 0x4, offset = 0x4, fixed_abs, tag = 'smem constant byte address 0x4 - core index']
  #allocation1 [shape = 'u32[144,128]{1,0:T(1,128)}', space=vmem, size = 0x12000, scoped, tag = 'internal scratch']
  %s0 = inlined_call_operand.hbm [shape: f32[2,1,4,52], index: 0, kind: input, shape index: {}]
  %s1 = inlined_call_operand.vmem [shape: f32[3,4,4], index: 1, kind: input, shape index: {}]
  %s2 = inlined_call_operand.vmem [shape: f32[4,1], index: 2, kind: input, shape index: {}]
  %s3 = inlined_call_operand.vmem [shape: f32[3,4,4], index: 3, kind: input, shape index: {}]
  %s4 = inlined_call_operand.vmem [shape: f32[4,1], index: 4, kind: input, shape index: {}]
  %s5 = inlined_call_operand.vmem [shape: f32[3,4,4], index: 5, kind: input, shape index: {}]
  %s6 = inlined_call_operand.vmem [shape: f32[4,1], index: 6, kind: input, shape index: {}]
  %s7 = inlined_call_operand.vmem [shape: f32[3,4,4], index: 7, kind: input, shape index: {}]
  %s8 = inlined_call_operand.vmem [shape: f32[4,1], index: 8, kind: input, shape index: {}]
  %s9 = inlined_call_operand.vmem [shape: f32[3,4,4], index: 9, kind: input, shape index: {}]
  %s10 = inlined_call_operand.vmem [shape: f32[4,1], index: 10, kind: input, shape index: {}]
  %s11 = inlined_call_operand.hbm [shape: f32[3,4,4], index: 11, kind: input, shape index: {}]
  %s12 = inlined_call_operand.vmem [shape: f32[4,1], index: 12, kind: input, shape index: {}]
  %s13 = inlined_call_operand.hbm [shape: f32[2,4,16], index: 13, kind: output, shape index: {}]
  %s14 = sld [smem:[#allocation0]]
  $region93: #{tpu_custom_call.1} parent=0
    _
  %s16 = ssub.s32 1, %s14
  %s17 = scalar_select 0, %s16, %s14
  $region1: #{tpu_custom_call.1} parent=0
    #allocation2 [shape = 'u8[4096]{0}', space=vmem, size = 0x1000, scoped, tag = 'input window, operand 0']
    #allocation3 [shape = 's32[2]{0}', space=sflag, size = 0x8, scoped, tag = 'scoped memory for tpu_custom_call.1']
    #allocation4 [shape = 's32[2]{0}', space=sflag, size = 0x8, scoped, tag = 'scoped memory for tpu_custom_call.1']
    #allocation5 [shape = 'u8[6144]{0}', space=vmem, size = 0x1800, scoped, tag = 'input window, operand 11, single buffered']
    #allocation6 [shape = 's32[1]{0}', space=sflag, size = 0x4, scoped, tag = 'scoped memory for tpu_custom_call.1']
    #allocation7 [shape = 'u8[4096]{0}', space=vmem, size = 0x1000, scoped, tag = 'output window, operand 0']
    %18 = vsyncpa [#allocation3], 0
    %s19 = scalar_lea.sflag [#allocation3], 1
    %20 = vsyncpa %s19, 0
    %21 = vsyncpa [#allocation6], 0
    %22 = vsyncpa [#allocation4], 0
    %s23 = scalar_lea.sflag [#allocation4], 1
    %24 = vsyncpa %s23, 0
    loop: start=0, step=1, limit=4
    $region2: #{tpu_custom_call.1} parent=1 // loop_pre_header
      _
    $region3: #{tpu_custom_call.1} parent=1 // loop_header
      %s26 = sphi 0, %s30
      %p27 = scmp.ge.s32.totalorder %s26, 4
      %s33 = sphi 0, %s45
      %s34 = sphi 0, %s41
      %s35 = sphi 0, %s33
      %s36 = sphi 0, %s34
      %s37 = sphi 0, %s35
      %s38 = sphi 0, %s36
      %s50 = sphi 0, %s52
      %s53 = sphi 0, %s50
      %s54 = sphi 0, %s53
      %s70 = sphi 0, %s54
      %s74 = sphi 0, %s74
      %s76 = sphi 0, %s74
      %s77 = sphi 0, %s76
      %s91 = sphi 0, %s77
      %s95 = sphi 0, %s95
      %s97 = sphi 0, %s95
      %s98 = sphi 0, %s97
      %s112 = sphi 0, %s98
      %s116 = sphi 0, %s116
      %s118 = sphi 0, %s116
      %s119 = sphi 0, %s118
      %s133 = sphi 0, %s119
      %s137 = sphi 0, %s137
      %s139 = sphi 0, %s137
      %s140 = sphi 0, %s139
      %s154 = sphi 0, %s140
      %s158 = sphi 0, %s158
      %s160 = sphi 0, %s158
      %s161 = sphi 0, %s160
      %s175 = sphi 0, %s161
      %s179 = sphi 0, %s179
      %s181 = sphi 0, %s179
      %s182 = sphi 0, %s181
      %s196 = sphi 0, %s182
      %s200 = sphi 0, %s200
      %s202 = sphi 0, %s200
      %s203 = sphi 0, %s202
      %s217 = sphi 0, %s203
      %s221 = sphi 0, %s221
      %s223 = sphi 0, %s221
      %s224 = sphi 0, %s223
      %s238 = sphi 0, %s224
      %s242 = sphi 0, %s242
      %s244 = sphi 0, %s242
      %s245 = sphi 0, %s244
      %s259 = sphi 0, %s245
      %s263 = sphi 0, %s263
      %s265 = sphi 0, %s263
      %s266 = sphi 0, %s265
      %s280 = sphi 0, %s266
      %s284 = sphi 0, %s284
      %s286 = sphi 0, %s284
      %s287 = sphi 0, %s286
      %s301 = sphi 0, %s287
      %s305 = sphi 0, %s305
      %s307 = sphi 0, %s305
      %s308 = sphi 0, %s307
      %s322 = sphi 0, %s308
      %s330 = sphi 0, %s332
      %s333 = sphi 0, %s330
      %s334 = sphi 0, %s333
      %s350 = sphi 0, %s334
    $region4: #{tpu_custom_call.1} parent=1 // loop_header_branch
      %29 = sbr.rel (%p27) target = $region8
    $region5: #{tpu_custom_call.1} parent=1 // loop_body
      %s31 = ssub.s32 %s26, 1
      %s32 = ssub.s32 %s26, 2
      %s39 = sadd.s32 1, %s34
      %p40 = scmp.ge.s32.totalorder %s39, 1
      %s41 = scalar_select %p40, 0, %s39
      %s42 = sadd.s32 1, %s33
      %s43 = scalar_select %p40, %s42, %s33
      %p44 = scmp.ge.s32.totalorder %s43, 2
      %s45 = scalar_select %p44, 0, %s43
      %s46 = ssub.s32 %s33, %s45
      %s47 = ssub.s32 %s34, %s41
      %s48 = sor.u32 %s46, %s47
      %p49 = scmp.eq.s32.totalorder %s48, 0
      %s51 = sadd.s32 %s50, 1
      %s52 = scalar_select %p49, %s50, %s51
      %p55 = pneg %p49
      %p56 = scmp.eq.s32.totalorder %s26, 1
      %p57 = por %p55, %p56
      %p58 = scmp.ne.s32.totalorder %s50, %s53
      %p59 = scmp.eq.s32.totalorder %s26, 0
      %p60 = por %p58, %p59
      %p61 = scmp.ne.s32.totalorder %s50, %s53
      %p62 = scmp.eq.s32.totalorder %s31, 1
      %p63 = por %p61, %p62
      %p64 = scmp.ne.s32.totalorder %s53, %s54
      %p65 = scmp.eq.s32.totalorder %s31, 0
      %p66 = por %p64, %p65
      %p67 = scmp.ne.s32.totalorder %s53, %s54
      %p68 = scmp.eq.s32.totalorder %s32, 1
      %p69 = por %p67, %p68
      %p71 = scmp.ne.s32.totalorder %s54, %s70
      %p72 = scmp.eq.s32.totalorder %s32, 0
      %p73 = por %p71, %p72
      %s75 = sadd.s32 %s74, 1
      %p78 = scmp.eq.s32.totalorder %s26, 1
      %p79 = scmp.ne.s32.totalorder %s74, %s76
      %p80 = scmp.eq.s32.totalorder %s26, 0
      %p81 = por %p79, %p80
      %p82 = scmp.ne.s32.totalorder %s74, %s76
      %p83 = scmp.eq.s32.totalorder %s31, 1
      %p84 = por %p82, %p83
      %p85 = scmp.ne.s32.totalorder %s76, %s77
      %p86 = scmp.eq.s32.totalorder %s31, 0
      %p87 = por %p85, %p86
      %p88 = scmp.ne.s32.totalorder %s76, %s77
      %p89 = scmp.eq.s32.totalorder %s32, 1
      %p90 = por %p88, %p89
      %p92 = scmp.ne.s32.totalorder %s77, %s91
      %p93 = scmp.eq.s32.totalorder %s32, 0
      %p94 = por %p92, %p93
      %s96 = sadd.s32 %s95, 1
      %p99 = scmp.eq.s32.totalorder %s26, 1
      %p100 = scmp.ne.s32.totalorder %s95, %s97
      %p101 = scmp.eq.s32.totalorder %s26, 0
      %p102 = por %p100, %p101
      %p103 = scmp.ne.s32.totalorder %s95, %s97
      %p104 = scmp.eq.s32.totalorder %s31, 1
      %p105 = por %p103, %p104
      %p106 = scmp.ne.s32.totalorder %s97, %s98
      %p107 = scmp.eq.s32.totalorder %s31, 0
      %p108 = por %p106, %p107
      %p109 = scmp.ne.s32.totalorder %s97, %s98
      %p110 = scmp.eq.s32.totalorder %s32, 1
      %p111 = por %p109, %p110
      %p113 = scmp.ne.s32.totalorder %s98, %s112
      %p114 = scmp.eq.s32.totalorder %s32, 0
      %p115 = por %p113, %p114
      %s117 = sadd.s32 %s116, 1
      %p120 = scmp.eq.s32.totalorder %s26, 1
      %p121 = scmp.ne.s32.totalorder %s116, %s118
      %p122 = scmp.eq.s32.totalorder %s26, 0
      %p123 = por %p121, %p122
      %p124 = scmp.ne.s32.totalorder %s116, %s118
      %p125 = scmp.eq.s32.totalorder %s31, 1
      %p126 = por %p124, %p125
      %p127 = scmp.ne.s32.totalorder %s118, %s119
      %p128 = scmp.eq.s32.totalorder %s31, 0
      %p129 = por %p127, %p128
      %p130 = scmp.ne.s32.totalorder %s118, %s119
      %p131 = scmp.eq.s32.totalorder %s32, 1
      %p132 = por %p130, %p131
      %p134 = scmp.ne.s32.totalorder %s119, %s133
      %p135 = scmp.eq.s32.totalorder %s32, 0
      %p136 = por %p134, %p135
      %s138 = sadd.s32 %s137, 1
      %p141 = scmp.eq.s32.totalorder %s26, 1
      %p142 = scmp.ne.s32.totalorder %s137, %s139
      %p143 = scmp.eq.s32.totalorder %s26, 0
      %p144 = por %p142, %p143
      %p145 = scmp.ne.s32.totalorder %s137, %s139
      %p146 = scmp.eq.s32.totalorder %s31, 1
      %p147 = por %p145, %p146
      %p148 = scmp.ne.s32.totalorder %s139, %s140
      %p149 = scmp.eq.s32.totalorder %s31, 0
      %p150 = por %p148, %p149
      %p151 = scmp.ne.s32.totalorder %s139, %s140
      %p152 = scmp.eq.s32.totalorder %s32, 1
      %p153 = por %p151, %p152
      %p155 = scmp.ne.s32.totalorder %s140, %s154
      %p156 = scmp.eq.s32.totalorder %s32, 0
      %p157 = por %p155, %p156
      %s159 = sadd.s32 %s158, 1
      %p162 = scmp.eq.s32.totalorder %s26, 1
      %p163 = scmp.ne.s32.totalorder %s158, %s160
      %p164 = scmp.eq.s32.totalorder %s26, 0
      %p165 = por %p163, %p164
      %p166 = scmp.ne.s32.totalorder %s158, %s160
      %p167 = scmp.eq.s32.totalorder %s31, 1
      %p168 = por %p166, %p167
      %p169 = scmp.ne.s32.totalorder %s160, %s161
      %p170 = scmp.eq.s32.totalorder %s31, 0
      %p171 = por %p169, %p170
      %p172 = scmp.ne.s32.totalorder %s160, %s161
      %p173 = scmp.eq.s32.totalorder %s32, 1
      %p174 = por %p172, %p173
      %p176 = scmp.ne.s32.totalorder %s161, %s175
      %p177 = scmp.eq.s32.totalorder %s32, 0
      %p178 = por %p176, %p177
      %s180 = sadd.s32 %s179, 1
      %p183 = scmp.eq.s32.totalorder %s26, 1
      %p184 = scmp.ne.s32.totalorder %s179, %s181
      %p185 = scmp.eq.s32.totalorder %s26, 0
      %p186 = por %p184, %p185
      %p187 = scmp.ne.s32.totalorder %s179, %s181
      %p188 = scmp.eq.s32.totalorder %s31, 1
      %p189 = por %p187, %p188
      %p190 = scmp.ne.s32.totalorder %s181, %s182
      %p191 = scmp.eq.s32.totalorder %s31, 0
      %p192 = por %p190, %p191
      %p193 = scmp.ne.s32.totalorder %s181, %s182
      %p194 = scmp.eq.s32.totalorder %s32, 1
      %p195 = por %p193, %p194
      %p197 = scmp.ne.s32.totalorder %s182, %s196
      %p198 = scmp.eq.s32.totalorder %s32, 0
      %p199 = por %p197, %p198
      %s201 = sadd.s32 %s200, 1
      %p204 = scmp.eq.s32.totalorder %s26, 1
      %p205 = scmp.ne.s32.totalorder %s200, %s202
      %p206 = scmp.eq.s32.totalorder %s26, 0
      %p207 = por %p205, %p206
      %p208 = scmp.ne.s32.totalorder %s200, %s202
      %p209 = scmp.eq.s32.totalorder %s31, 1
      %p210 = por %p208, %p209
      %p211 = scmp.ne.s32.totalorder %s202, %s203
      %p212 = scmp.eq.s32.totalorder %s31, 0
      %p213 = por %p211, %p212
      %p214 = scmp.ne.s32.totalorder %s202, %s203
      %p215 = scmp.eq.s32.totalorder %s32, 1
      %p216 = por %p214, %p215
      %p218 = scmp.ne.s32.totalorder %s203, %s217
      %p219 = scmp.eq.s32.totalorder %s32, 0
      %p220 = por %p218, %p219
      %s222 = sadd.s32 %s221, 1
      %p225 = scmp.eq.s32.totalorder %s26, 1
      %p226 = scmp.ne.s32.totalorder %s221, %s223
      %p227 = scmp.eq.s32.totalorder %s26, 0
      %p228 = por %p226, %p227
      %p229 = scmp.ne.s32.totalorder %s221, %s223
      %p230 = scmp.eq.s32.totalorder %s31, 1
      %p231 = por %p229, %p230
      %p232 = scmp.ne.s32.totalorder %s223, %s224
      %p233 = scmp.eq.s32.totalorder %s31, 0
      %p234 = por %p232, %p233
      %p235 = scmp.ne.s32.totalorder %s223, %s224
      %p236 = scmp.eq.s32.totalorder %s32, 1
      %p237 = por %p235, %p236
      %p239 = scmp.ne.s32.totalorder %s224, %s238
      %p240 = scmp.eq.s32.totalorder %s32, 0
      %p241 = por %p239, %p240
      %s243 = sadd.s32 %s242, 1
      %p246 = scmp.eq.s32.totalorder %s26, 1
      %p247 = scmp.ne.s32.totalorder %s242, %s244
      %p248 = scmp.eq.s32.totalorder %s26, 0
      %p249 = por %p247, %p248
      %p250 = scmp.ne.s32.totalorder %s242, %s244
      %p251 = scmp.eq.s32.totalorder %s31, 1
      %p252 = por %p250, %p251
      %p253 = scmp.ne.s32.totalorder %s244, %s245
      %p254 = scmp.eq.s32.totalorder %s31, 0
      %p255 = por %p253, %p254
      %p256 = scmp.ne.s32.totalorder %s244, %s245
      %p257 = scmp.eq.s32.totalorder %s32, 1
      %p258 = por %p256, %p257
      %p260 = scmp.ne.s32.totalorder %s245, %s259
      %p261 = scmp.eq.s32.totalorder %s32, 0
      %p262 = por %p260, %p261
      %s264 = sadd.s32 %s263, 1
      %p267 = scmp.eq.s32.totalorder %s26, 1
      %p268 = scmp.ne.s32.totalorder %s263, %s265
      %p269 = scmp.eq.s32.totalorder %s26, 0
      %p270 = por %p268, %p269
      %p271 = scmp.ne.s32.totalorder %s263, %s265
      %p272 = scmp.eq.s32.totalorder %s31, 1
      %p273 = por %p271, %p272
      %p274 = scmp.ne.s32.totalorder %s265, %s266
      %p275 = scmp.eq.s32.totalorder %s31, 0
      %p276 = por %p274, %p275
      %p277 = scmp.ne.s32.totalorder %s265, %s266
      %p278 = scmp.eq.s32.totalorder %s32, 1
      %p279 = por %p277, %p278
      %p281 = scmp.ne.s32.totalorder %s266, %s280
      %p282 = scmp.eq.s32.totalorder %s32, 0
      %p283 = por %p281, %p282
      %s285 = sadd.s32 %s284, 1
      %p288 = scmp.eq.s32.totalorder %s26, 1
      %p289 = scmp.ne.s32.totalorder %s284, %s286
      %p290 = scmp.eq.s32.totalorder %s26, 0
      %p291 = por %p289, %p290
      %p292 = scmp.ne.s32.totalorder %s284, %s286
      %p293 = scmp.eq.s32.totalorder %s31, 1
      %p294 = por %p292, %p293
      %p295 = scmp.ne.s32.totalorder %s286, %s287
      %p296 = scmp.eq.s32.totalorder %s31, 0
      %p297 = por %p295, %p296
      %p298 = scmp.ne.s32.totalorder %s286, %s287
      %p299 = scmp.eq.s32.totalorder %s32, 1
      %p300 = por %p298, %p299
      %p302 = scmp.ne.s32.totalorder %s287, %s301
      %p303 = scmp.eq.s32.totalorder %s32, 0
      %p304 = por %p302, %p303
      %s306 = sadd.s32 %s305, 1
      %p309 = scmp.eq.s32.totalorder %s26, 1
      %p310 = scmp.ne.s32.totalorder %s305, %s307
      %p311 = scmp.eq.s32.totalorder %s26, 0
      %p312 = por %p310, %p311
      %p313 = scmp.ne.s32.totalorder %s305, %s307
      %p314 = scmp.eq.s32.totalorder %s31, 1
      %p315 = por %p313, %p314
      %p316 = scmp.ne.s32.totalorder %s307, %s308
      %p317 = scmp.eq.s32.totalorder %s31, 0
      %p318 = por %p316, %p317
      %p319 = scmp.ne.s32.totalorder %s307, %s308
      %p320 = scmp.eq.s32.totalorder %s32, 1
      %p321 = por %p319, %p320
      %p323 = scmp.ne.s32.totalorder %s308, %s322
      %p324 = scmp.eq.s32.totalorder %s32, 0
      %p325 = por %p323, %p324
      %s326 = ssub.s32 %s33, %s45
      %s327 = ssub.s32 %s34, %s41
      %s328 = sor.u32 %s326, %s327
      %p329 = scmp.eq.s32.totalorder %s328, 0
      %s331 = sadd.s32 %s330, 1
      %s332 = scalar_select %p329, %s330, %s331
      %p335 = pneg %p329
      %p336 = scmp.eq.s32.totalorder %s26, 1
      %p337 = por %p335, %p336
      %p338 = scmp.ne.s32.totalorder %s330, %s333
      %p339 = scmp.eq.s32.totalorder %s26, 0
      %p340 = por %p338, %p339
      %p341 = scmp.ne.s32.totalorder %s330, %s333
      %p342 = scmp.eq.s32.totalorder %s31, 1
      %p343 = por %p341, %p342
      %p344 = scmp.ne.s32.totalorder %s333, %s334
      %p345 = scmp.eq.s32.totalorder %s31, 0
      %p346 = por %p344, %p345
      %p347 = scmp.ne.s32.totalorder %s333, %s334
      %p348 = scmp.eq.s32.totalorder %s32, 1
      %p349 = por %p347, %p348
      %p351 = scmp.ne.s32.totalorder %s334, %s350
      %p352 = scmp.eq.s32.totalorder %s32, 0
      %p353 = por %p351, %p352
      %p354 = scmp.le.s32.totalorder 1, %s26
      %p355 = scmp.lt.s32.totalorder %s26, 3
      %p356 = pnand %p354, %p355
      %p357 = pneg %p356
      // Predicated region
      $region9: #{tpu_custom_call.1} parent=5 // pred_check
        _
      $region10: #{tpu_custom_call.1} parent=5 // pred_check_branch
        %359 = sbr.rel (%p356) target = $region12
      $region11: #{tpu_custom_call.1} parent=5 // pred_region
        %s360 = ssub.s32 %s26, 1
        // Predicated region
        $region13: #{tpu_custom_call.1} parent=11 // pred_check
          %p361 = pneg %p87
        $region14: #{tpu_custom_call.1} parent=11 // pred_check_branch
          %363 = sbr.rel (%p361) target = $region16
        $region15: #{tpu_custom_call.1} parent=11 // pred_region
          _
        $region16: #{tpu_custom_call.1} parent=11 // pred_fallthru
          _
        // Predicated region
        $region17: #{tpu_custom_call.1} parent=11 // pred_check
          %p364 = pneg %p108
        $region18: #{tpu_custom_call.1} parent=11 // pred_check_branch
          %366 = sbr.rel (%p364) target = $region20
        $region19: #{tpu_custom_call.1} parent=11 // pred_region
          _
        $region20: #{tpu_custom_call.1} parent=11 // pred_fallthru
          _
        // Predicated region
        $region21: #{tpu_custom_call.1} parent=11 // pred_check
          %p367 = pneg %p129
        $region22: #{tpu_custom_call.1} parent=11 // pred_check_branch
          %369 = sbr.rel (%p367) target = $region24
        $region23: #{tpu_custom_call.1} parent=11 // pred_region
          _
        $region24: #{tpu_custom_call.1} parent=11 // pred_fallthru
          _
        // Predicated region
        $region25: #{tpu_custom_call.1} parent=11 // pred_check
          %p370 = pneg %p150
        $region26: #{tpu_custom_call.1} parent=11 // pred_check_branch
          %372 = sbr.rel (%p370) target = $region28
        $region27: #{tpu_custom_call.1} parent=11 // pred_region
          _
        $region28: #{tpu_custom_call.1} parent=11 // pred_fallthru
          _
        // Predicated region
        $region29: #{tpu_custom_call.1} parent=11 // pred_check
          %p373 = pneg %p171
        $region30: #{tpu_custom_call.1} parent=11 // pred_check_branch
          %375 = sbr.rel (%p373) target = $region32
        $region31: #{tpu_custom_call.1} parent=11 // pred_region
          _
        $region32: #{tpu_custom_call.1} parent=11 // pred_fallthru
          _
        // Predicated region
        $region33: #{tpu_custom_call.1} parent=11 // pred_check
          %p376 = pneg %p192
        $region34: #{tpu_custom_call.1} parent=11 // pred_check_branch
          %378 = sbr.rel (%p376) target = $region36
        $region35: #{tpu_custom_call.1} parent=11 // pred_region
          _
        $region36: #{tpu_custom_call.1} parent=11 // pred_fallthru
          _
        // Predicated region
        $region37: #{tpu_custom_call.1} parent=11 // pred_check
          %p379 = pneg %p213
        $region38: #{tpu_custom_call.1} parent=11 // pred_check_branch
          %381 = sbr.rel (%p379) target = $region40
        $region39: #{tpu_custom_call.1} parent=11 // pred_region
          _
        $region40: #{tpu_custom_call.1} parent=11 // pred_fallthru
          _
        // Predicated region
        $region41: #{tpu_custom_call.1} parent=11 // pred_check
          %p382 = pneg %p234
        $region42: #{tpu_custom_call.1} parent=11 // pred_check_branch
          %384 = sbr.rel (%p382) target = $region44
        $region43: #{tpu_custom_call.1} parent=11 // pred_region
          _
        $region44: #{tpu_custom_call.1} parent=11 // pred_fallthru
          _
        // Predicated region
        $region45: #{tpu_custom_call.1} parent=11 // pred_check
          %p385 = pneg %p255
        $region46: #{tpu_custom_call.1} parent=11 // pred_check_branch
          %387 = sbr.rel (%p385) target = $region48
        $region47: #{tpu_custom_call.1} parent=11 // pred_region
          _
        $region48: #{tpu_custom_call.1} parent=11 // pred_fallthru
          _
        // Predicated region
        $region49: #{tpu_custom_call.1} parent=11 // pred_check
          %p388 = pneg %p276
        $region50: #{tpu_custom_call.1} parent=11 // pred_check_branch
          %390 = sbr.rel (%p388) target = $region52
        $region51: #{tpu_custom_call.1} parent=11 // pred_region
          _
        $region52: #{tpu_custom_call.1} parent=11 // pred_fallthru
          _
        // Predicated region
        $region53: #{tpu_custom_call.1} parent=11 // pred_check
          %p391 = pneg %p297
        $region54: #{tpu_custom_call.1} parent=11 // pred_check_branch
          %393 = sbr.rel (%p391) target = $region56
        $region55: #{tpu_custom_call.1} parent=11 // pred_region
          %s395 = ssub.s32 192, 192
          %396 = vsyncadd [#allocation6], %s395
          %s397 = sshll.u32 [#allocation5], 4
          %s398 = int_to_ptr.vmem [resolvable:$true] %s397
          %403 = dma.hbm_to_vmem [thread:$0]  %s11, 192, %s398, [#allocation6], 64, 64, 4
        $region56: #{tpu_custom_call.1} parent=11 // pred_fallthru
          _
        // Predicated region
        $region57: #{tpu_custom_call.1} parent=11 // pred_check
          %p404 = pneg %p318
        $region58: #{tpu_custom_call.1} parent=11 // pred_check_branch
          %406 = sbr.rel (%p404) target = $region60
        $region59: #{tpu_custom_call.1} parent=11 // pred_region
          _
        $region60: #{tpu_custom_call.1} parent=11 // pred_fallthru
          _
      $region12: #{tpu_custom_call.1} parent=5 // pred_fallthru
        _
      %p407 = scmp.lt.s32.totalorder %s26, 2
      // Predicated region
      $region61: #{tpu_custom_call.1} parent=5 // pred_check
        %p408 = pneg %p407
      $region62: #{tpu_custom_call.1} parent=5 // pred_check_branch
        %410 = sbr.rel (%p408) target = $region64
      $region63: #{tpu_custom_call.1} parent=5 // pred_region
        // Predicated region
        $region65: #{tpu_custom_call.1} parent=63 // pred_check
          %p411 = pneg %p60
        $region66: #{tpu_custom_call.1} parent=63 // pred_check_branch
          %413 = sbr.rel (%p411) target = $region68
        $region67: #{tpu_custom_call.1} parent=63 // pred_region
          %s414 = sand.u32 %s50, 1
          %s415 = scalar_lea.sflag [#allocation3], %s414
          %s416 = sand.u32 %s50, 1
          %s417 = smul.addr %s416, 4
          %s418 = scalar_lea.vmem [#allocation2], %s417
          %s420 = ssub.s32 64, 64
          %421 = vsyncadd %s415, %s420
          %s422 = sadd.s32 %s34, %s33
          %s423 = smul.addr %s422, 64
          %s424 = scalar_lea.hbm %s0, %s423
          %s426 = sshll.u32 %s418, 4
          %s427 = int_to_ptr.vmem [resolvable:$true] %s426
          %429 = dma.hbm_to_vmem [thread:$0]  %s424, 64, %s427, %s415
        $region68: #{tpu_custom_call.1} parent=63 // pred_fallthru
          _
      $region64: #{tpu_custom_call.1} parent=5 // pred_fallthru
        _
      %p430 = scmp.le.s32.totalorder 1, %s26
      %p431 = scmp.lt.s32.totalorder %s26, 3
      %p432 = pnand %p430, %p431
      %p433 = pneg %p432
      // Predicated region
      $region69: #{tpu_custom_call.1} parent=5 // pred_check
        _
      $region70: #{tpu_custom_call.1} parent=5 // pred_check_branch
        %435 = sbr.rel (%p432) target = $region72
      $region71: #{tpu_custom_call.1} parent=5 // pred_region
        %s436 = ssub.s32 %s26, 1
        %s437 = sand.u32 %s53, 1
        %s438 = scalar_lea.sflag [#allocation3], %s437
        %s439 = sand.u32 %s53, 1
        %s440 = smul.addr %s439, 4
        %s441 = scalar_lea.vmem [#allocation2], %s440
        // Predicated region
        $region73: #{tpu_custom_call.1} parent=71 // pred_check
          %p442 = pneg %p66
        $region74: #{tpu_custom_call.1} parent=71 // pred_check_branch
          %444 = sbr.rel (%p442) target = $region76
        $region75: #{tpu_custom_call.1} parent=71 // pred_region
          %445 = dma.done %s438, 64
        $region76: #{tpu_custom_call.1} parent=71 // pred_fallthru
          _
        // Predicated region
        $region77: #{tpu_custom_call.1} parent=71 // pred_check
          %p446 = pneg %p297
        $region78: #{tpu_custom_call.1} parent=71 // pred_check_branch
          %448 = sbr.rel (%p446) target = $region80
        $region79: #{tpu_custom_call.1} parent=71 // pred_region
          %449 = dma.done [#allocation6], 192
        $region80: #{tpu_custom_call.1} parent=71 // pred_fallthru
          _
        %s450 = sand.u32 %s53, 1
        %s451 = scalar_lea.sflag [#allocation3], %s450
        %s452 = sand.u32 %s53, 1
        %s453 = smul.addr %s452, 4
        %s454 = scalar_lea.vmem [#allocation2], %s453
        %p455 = pneg %p66
        %p456 = pneg %p63
        %p457 = pneg %p87
        %p458 = pneg %p84
        %p459 = pneg %p108
        %p460 = pneg %p105
        %p461 = pneg %p129
        %p462 = pneg %p126
        %p463 = pneg %p150
        %p464 = pneg %p147
        %p465 = pneg %p171
        %p466 = pneg %p168
        %p467 = pneg %p192
        %p468 = pneg %p189
        %p469 = pneg %p213
        %p470 = pneg %p210
        %p471 = pneg %p234
        %p472 = pneg %p231
        %p473 = pneg %p255
        %p474 = pneg %p252
        %p475 = pneg %p276
        %p476 = pneg %p273
        %p477 = pneg %p297
        %p478 = pneg %p294
        %p479 = pneg %p318
        %p480 = pneg %p315
        %p481 = pneg %p346
        %p482 = pneg %p343
        %s483 = sand.u32 %s333, 1
        %s484 = scalar_lea.sflag [#allocation4], %s483
        %s485 = sand.u32 %s333, 1
        %s486 = smul.addr %s485, 4
        %s487 = scalar_lea.vmem [#allocation7], %s486
        %v488 = vld [vmem:[%s441] sm:$0xf]
        %s489 = smul.u32 %s36, 16
        %s490 = ssub.s32 %s489, 18
        %v491 = vlaneseq
        %v492 = vand.u32 %v491, 127
        %v493 = vstv %s490
        %v494 = vadd.s32 %v493, %v492
        %vm495 = vcmp.ge.s32.totalorder %v494, 0
        %vm496 = vcmp.lt.s32.totalorder %v494, 16
        %vm497 = vmand %vm495, %vm496
        %v498 = vsel %vm497, 1, 0
        %vm499 = vcmp.eq.s32.totalorder %v498, 1
        %v500 = vsel %vm499, %v488, 0.0
        %v501 = vld [vmem:[%s1] sm:$0xf]
        %s502 = scalar_lea.vmem %s1, 4
        %v503 = vld [vmem:[%s502] sm:$0xf]
        %505 = vrot.lane.b32.xlu0 %v500, 127
        %v506 = vpop.permute.xlu0 %505
        %vm507 = vcmask 31744
        %v509 = vsel %vm507, %v503, 0
        %vm511 = vcmask 1043456
        %v512 = vsel %vm511, %v506, 0
        %514 = vmatprep.subr.mxu0 0.0
        %515 = vmatpush1.msra.mxu0 %v512
        %516 = vmatprep.subr.mxu0 0.0
        %517 = vmatpush1.msra.mxu0 0.0
        %518 = vmatprep.subr.mxu0 0.0
        %519 = vmatpush1.msra.mxu0 0.0
        %520 = vmatprep.subr.mxu0 0.0
        %521 = vmatpush1.msra.mxu0 0.0
        %522 = vmatprep.subr.mxu0 0.0
        %523 = vmatpush1.msra.mxu0 0.0
        %524 = vmatprep.subr.mxu0 0.0
        %525 = vmatpush1.msra.mxu0 0.0
        %526 = vmatprep.subr.mxu0 0.0
        %527 = vmatpush1.msra.mxu0 0.0
        %528 = vmatprep.subr.mxu0 0.0
        %529 = vmatpush1.msra.mxu0 0.0
        %530 = vmatprep.subr.mxu0 0.0
        %531 = vmatpush1.msra.mxu0 0.0
        %532 = vmatprep.subr.mxu0 0.0
        %533 = vmatpush1.msra.mxu0 0.0
        %534 = vmatprep.subr.mxu0 0.0
        %535 = vmatpush1.msra.mxu0 0.0
        %536 = vmatprep.subr.mxu0 0.0
        %537 = vmatpush1.msra.mxu0 0.0
        %538 = vmatprep.subr.mxu0 0.0
        %539 = vmatpush1.msra.mxu0 0.0
        %540 = vmatprep.subr.mxu0 0.0
        %541 = vmatpush1.msra.mxu0 0.0
        %542 = vmatprep.subr.mxu0 0.0
        %543 = vmatpush1.msra.mxu0 0.0
        %544 = vmatprep.subr.mxu0 0.0
        %545 = vmatpush1.msra.mxu0 0.0
        %546 = vmatprep.subr.mxu0 0.0
        %547 = vmatpush1.msra.mxu0 0.0
        %548 = vmatprep.subr.mxu0 0.0
        %549 = vmatpush1.msra.mxu0 0.0
        %550 = vmatprep.subr.mxu0 0.0
        %551 = vmatpush1.msra.mxu0 0.0
        %552 = vmatprep.subr.mxu0 0.0
        %553 = vmatpush1.msra.mxu0 0.0
        %554 = vmatprep.subr.mxu0 0.0
        %555 = vmatpush1.msra.mxu0 0.0
        %556 = vmatprep.subr.mxu0 0.0
        %557 = vmatpush1.msra.mxu0 0.0
        %558 = vmatprep.subr.mxu0 0.0
        %559 = vmatpush1.msra.mxu0 0.0
        %560 = vmatprep.subr.mxu0 0.0
        %561 = vmatpush1.msra.mxu0 0.0
        %562 = vmatprep.subr.mxu0 0.0
        %563 = vmatpush1.msra.mxu0 0.0
        %564 = vmatprep.subr.mxu0 0.0
        %565 = vmatpush1.msra.mxu0 0.0
        %566 = vmatprep.subr.mxu0 0.0
        %567 = vmatpush1.msra.mxu0 0.0
        %568 = vmatprep.subr.mxu0 0.0
        %569 = vmatpush1.msra.mxu0 0.0
        %570 = vmatprep.subr.mxu0 0.0
        %571 = vmatpush1.msra.mxu0 0.0
        %572 = vmatprep.subr.mxu0 0.0
        %573 = vmatpush1.msra.mxu0 0.0
        %574 = vmatprep.subr.mxu0 0.0
        %575 = vmatpush1.msra.mxu0 0.0
        %576 = vmatprep.subr.mxu0 0.0
        %577 = vmatpush1.msra.mxu0 0.0
        %578 = vmatprep.mubr.f32.mxu0 0.0
        %579 = vmatmul.mubr.f32.gmra.mrb[0].mxu0 %v509
        %v580 = vpop.f32.mrb[0].mxu0
        %v581 = vadd.f32 0.0, %v580
        %v582 = vpop.f32.mrb[0].mxu0
        %583 = vdwg.mxu0
        %v585 = vsel %vm507, %v501, 0
        %v587 = vsel %vm511, %v500, 0
        %589 = vmatprep.subr.mxu0 0.0
        %590 = vmatpush1.msra.mxu0 %v587
        %591 = vmatprep.subr.mxu0 0.0
        %592 = vmatpush1.msra.mxu0 0.0
        %593 = vmatprep.subr.mxu0 0.0
        %594 = vmatpush1.msra.mxu0 0.0
        %595 = vmatprep.subr.mxu0 0.0
        %596 = vmatpush1.msra.mxu0 0.0
        %597 = vmatprep.subr.mxu0 0.0
        %598 = vmatpush1.msra.mxu0 0.0
        %599 = vmatprep.subr.mxu0 0.0
        %600 = vmatpush1.msra.mxu0 0.0
        %601 = vmatprep.subr.mxu0 0.0
        %602 = vmatpush1.msra.mxu0 0.0
        %603 = vmatprep.subr.mxu0 0.0
        %604 = vmatpush1.msra.mxu0 0.0
        %605 = vmatprep.subr.mxu0 0.0
        %606 = vmatpush1.msra.mxu0 0.0
        %607 = vmatprep.subr.mxu0 0.0
        %608 = vmatpush1.msra.mxu0 0.0
        %609 = vmatprep.subr.mxu0 0.0
        %610 = vmatpush1.msra.mxu0 0.0
        %611 = vmatprep.subr.mxu0 0.0
        %612 = vmatpush1.msra.mxu0 0.0
        %613 = vmatprep.subr.mxu0 0.0
        %614 = vmatpush1.msra.mxu0 0.0
        %615 = vmatprep.subr.mxu0 0.0
        %616 = vmatpush1.msra.mxu0 0.0
        %617 = vmatprep.subr.mxu0 0.0
        %618 = vmatpush1.msra.mxu0 0.0
        %619 = vmatprep.subr.mxu0 0.0
        %620 = vmatpush1.msra.mxu0 0.0
        %621 = vmatprep.subr.mxu0 0.0
        %622 = vmatpush1.msra.mxu0 0.0
        %623 = vmatprep.subr.mxu0 0.0
        %624 = vmatpush1.msra.mxu0 0.0
        %625 = vmatprep.subr.mxu0 0.0
        %626 = vmatpush1.msra.mxu0 0.0
        %627 = vmatprep.subr.mxu0 0.0
        %628 = vmatpush1.msra.mxu0 0.0
        %629 = vmatprep.subr.mxu0 0.0
        %630 = vmatpush1.msra.mxu0 0.0
        %631 = vmatprep.subr.mxu0 0.0
        %632 = vmatpush1.msra.mxu0 0.0
        %633 = vmatprep.subr.mxu0 0.0
        %634 = vmatpush1.msra.mxu0 0.0
        %635 = vmatprep.subr.mxu0 0.0
        %636 = vmatpush1.msra.mxu0 0.0
        %637 = vmatprep.subr.mxu0 0.0
        %638 = vmatpush1.msra.mxu0 0.0
        %639 = vmatprep.subr.mxu0 0.0
        %640 = vmatpush1.msra.mxu0 0.0
        %641 = vmatprep.subr.mxu0 0.0
        %642 = vmatpush1.msra.mxu0 0.0
        %643 = vmatprep.subr.mxu0 0.0
        %644 = vmatpush1.msra.mxu0 0.0
        %645 = vmatprep.subr.mxu0 0.0
        %646 = vmatpush1.msra.mxu0 0.0
        %647 = vmatprep.subr.mxu0 0.0
        %648 = vmatpush1.msra.mxu0 0.0
        %649 = vmatprep.subr.mxu0 0.0
        %650 = vmatpush1.msra.mxu0 0.0
        %651 = vmatprep.subr.mxu0 0.0
        %652 = vmatpush1.msra.mxu0 0.0
        %653 = vmatprep.mubr.f32.mxu0 0.0
        %654 = vmatmul.mubr.f32.gmra.mrb[0].mxu0 %v585
        %v655 = vpop.f32.mrb[0].mxu0
        %v656 = vadd.f32 %v581, %v655
        %v657 = vpop.f32.mrb[0].mxu0
        %658 = vdwg.mxu0
        %s659 = scalar_lea.vmem %s1, 8
        %v660 = vld [vmem:[%s659] sm:$0xf]
        %661 = vrot.lane.b32.xlu0 %v500, 126
        %v662 = vpop.permute.xlu0 %661
        %v664 = vsel %vm507, %v660, 0
        %v666 = vsel %vm511, %v662, 0
        %668 = vmatprep.subr.mxu0 0.0
        %669 = vmatpush1.msra.mxu0 %v666
        %670 = vmatprep.subr.mxu0 0.0
        %671 = vmatpush1.msra.mxu0 0.0
        %672 = vmatprep.subr.mxu0 0.0
        %673 = vmatpush1.msra.mxu0 0.0
        %674 = vmatprep.subr.mxu0 0.0
        %675 = vmatpush1.msra.mxu0 0.0
        %676 = vmatprep.subr.mxu0 0.0
        %677 = vmatpush1.msra.mxu0 0.0
        %678 = vmatprep.subr.mxu0 0.0
        %679 = vmatpush1.msra.mxu0 0.0
        %680 = vmatprep.subr.mxu0 0.0
        %681 = vmatpush1.msra.mxu0 0.0
        %682 = vmatprep.subr.mxu0 0.0
        %683 = vmatpush1.msra.mxu0 0.0
        %684 = vmatprep.subr.mxu0 0.0
        %685 = vmatpush1.msra.mxu0 0.0
        %686 = vmatprep.subr.mxu0 0.0
        %687 = vmatpush1.msra.mxu0 0.0
        %688 = vmatprep.subr.mxu0 0.0
        %689 = vmatpush1.msra.mxu0 0.0
        %690 = vmatprep.subr.mxu0 0.0
        %691 = vmatpush1.msra.mxu0 0.0
        %692 = vmatprep.subr.mxu0 0.0
        %693 = vmatpush1.msra.mxu0 0.0
        %694 = vmatprep.subr.mxu0 0.0
        %695 = vmatpush1.msra.mxu0 0.0
        %696 = vmatprep.subr.mxu0 0.0
        %697 = vmatpush1.msra.mxu0 0.0
        %698 = vmatprep.subr.mxu0 0.0
        %699 = vmatpush1.msra.mxu0 0.0
        %700 = vmatprep.subr.mxu0 0.0
        %701 = vmatpush1.msra.mxu0 0.0
        %702 = vmatprep.subr.mxu0 0.0
        %703 = vmatpush1.msra.mxu0 0.0
        %704 = vmatprep.subr.mxu0 0.0
        %705 = vmatpush1.msra.mxu0 0.0
        %706 = vmatprep.subr.mxu0 0.0
        %707 = vmatpush1.msra.mxu0 0.0
        %708 = vmatprep.subr.mxu0 0.0
        %709 = vmatpush1.msra.mxu0 0.0
        %710 = vmatprep.subr.mxu0 0.0
        %711 = vmatpush1.msra.mxu0 0.0
        %712 = vmatprep.subr.mxu0 0.0
        %713 = vmatpush1.msra.mxu0 0.0
        %714 = vmatprep.subr.mxu0 0.0
        %715 = vmatpush1.msra.mxu0 0.0
        %716 = vmatprep.subr.mxu0 0.0
        %717 = vmatpush1.msra.mxu0 0.0
        %718 = vmatprep.subr.mxu0 0.0
        %719 = vmatpush1.msra.mxu0 0.0
        %720 = vmatprep.subr.mxu0 0.0
        %721 = vmatpush1.msra.mxu0 0.0
        %722 = vmatprep.subr.mxu0 0.0
        %723 = vmatpush1.msra.mxu0 0.0
        %724 = vmatprep.subr.mxu0 0.0
        %725 = vmatpush1.msra.mxu0 0.0
        %726 = vmatprep.subr.mxu0 0.0
        %727 = vmatpush1.msra.mxu0 0.0
        %728 = vmatprep.subr.mxu0 0.0
        %729 = vmatpush1.msra.mxu0 0.0
        %730 = vmatprep.subr.mxu0 0.0
        %731 = vmatpush1.msra.mxu0 0.0
        %732 = vmatprep.mubr.f32.mxu0 0.0
        %733 = vmatmul.mubr.f32.gmra.mrb[0].mxu0 %v664
        %v734 = vpop.f32.mrb[0].mxu0
        %v735 = vadd.f32 0.0, %v734
        %v736 = vpop.f32.mrb[0].mxu0
        %737 = vdwg.mxu0
        %v738 = vadd.f32 %v656, %v735
        %v739 = vld [vmem:[%s2] sm:$0xf]
        %741 = vset.pattern.permute.xlu0 0
        %742 = vperm.xlu0 %741, %v739
        %v743 = vpop.permute.xlu0 %742
        %v745 = vadd.f32 %v738, %v743
        %vm746 = vcmp.gt.f32.partialorder %v745, 0.0
        %v747 = vmul.f32 %v745, 0.1
        %v748 = vsel %vm746, %v745, %v747
        %s749 = sadd.s32 %s489, 4294967279
        %v750 = vstv %s749
        %v751 = vadd.s32 %v750, %v492
        %vm752 = vcmp.ge.s32.totalorder %v751, 0
        %vm753 = vcmp.lt.s32.totalorder %v751, 16
        %vm754 = vmand %vm752, %vm753
        %v755 = vsel %vm754, 1, 0
        %vm756 = vcmp.eq.s32.totalorder %v755, 1
        %v757 = vsel %vm756, %v748, 0.0
        %v758 = vld [vmem:[%s3] sm:$0xf]
        %s759 = scalar_lea.vmem %s3, 4
        %v760 = vld [vmem:[%s759] sm:$0xf]
        %762 = vrot.lane.b32.xlu0 %v757, 127
        %v763 = vpop.permute.xlu0 %762
        %v765 = vsel %vm507, %v760, 0
        %v767 = vsel %vm511, %v763, 0
        %769 = vmatprep.subr.mxu0 0.0
        %770 = vmatpush1.msra.mxu0 %v767
        %771 = vmatprep.subr.mxu0 0.0
        %772 = vmatpush1.msra.mxu0 0.0
        %773 = vmatprep.subr.mxu0 0.0
        %774 = vmatpush1.msra.mxu0 0.0
        %775 = vmatprep.subr.mxu0 0.0
        %776 = vmatpush1.msra.mxu0 0.0
        %777 = vmatprep.subr.mxu0 0.0
        %778 = vmatpush1.msra.mxu0 0.0
        %779 = vmatprep.subr.mxu0 0.0
        %780 = vmatpush1.msra.mxu0 0.0
        %781 = vmatprep.subr.mxu0 0.0
        %782 = vmatpush1.msra.mxu0 0.0
        %783 = vmatprep.subr.mxu0 0.0
        %784 = vmatpush1.msra.mxu0 0.0
        %785 = vmatprep.subr.mxu0 0.0
        %786 = vmatpush1.msra.mxu0 0.0
        %787 = vmatprep.subr.mxu0 0.0
        %788 = vmatpush1.msra.mxu0 0.0
        %789 = vmatprep.subr.mxu0 0.0
        %790 = vmatpush1.msra.mxu0 0.0
        %791 = vmatprep.subr.mxu0 0.0
        %792 = vmatpush1.msra.mxu0 0.0
        %793 = vmatprep.subr.mxu0 0.0
        %794 = vmatpush1.msra.mxu0 0.0
        %795 = vmatprep.subr.mxu0 0.0
        %796 = vmatpush1.msra.mxu0 0.0
        %797 = vmatprep.subr.mxu0 0.0
        %798 = vmatpush1.msra.mxu0 0.0
        %799 = vmatprep.subr.mxu0 0.0
        %800 = vmatpush1.msra.mxu0 0.0
        %801 = vmatprep.subr.mxu0 0.0
        %802 = vmatpush1.msra.mxu0 0.0
        %803 = vmatprep.subr.mxu0 0.0
        %804 = vmatpush1.msra.mxu0 0.0
        %805 = vmatprep.subr.mxu0 0.0
        %806 = vmatpush1.msra.mxu0 0.0
        %807 = vmatprep.subr.mxu0 0.0
        %808 = vmatpush1.msra.mxu0 0.0
        %809 = vmatprep.subr.mxu0 0.0
        %810 = vmatpush1.msra.mxu0 0.0
        %811 = vmatprep.subr.mxu0 0.0
        %812 = vmatpush1.msra.mxu0 0.0
        %813 = vmatprep.subr.mxu0 0.0
        %814 = vmatpush1.msra.mxu0 0.0
        %815 = vmatprep.subr.mxu0 0.0
        %816 = vmatpush1.msra.mxu0 0.0
        %817 = vmatprep.subr.mxu0 0.0
        %818 = vmatpush1.msra.mxu0 0.0
        %819 = vmatprep.subr.mxu0 0.0
        %820 = vmatpush1.msra.mxu0 0.0
        %821 = vmatprep.subr.mxu0 0.0
        %822 = vmatpush1.msra.mxu0 0.0
        %823 = vmatprep.subr.mxu0 0.0
        %824 = vmatpush1.msra.mxu0 0.0
        %825 = vmatprep.subr.mxu0 0.0
        %826 = vmatpush1.msra.mxu0 0.0
        %827 = vmatprep.subr.mxu0 0.0
        %828 = vmatpush1.msra.mxu0 0.0
        %829 = vmatprep.subr.mxu0 0.0
        %830 = vmatpush1.msra.mxu0 0.0
        %831 = vmatprep.subr.mxu0 0.0
        %832 = vmatpush1.msra.mxu0 0.0
        %833 = vmatprep.mubr.f32.mxu0 0.0
        %834 = vmatmul.mubr.f32.gmra.mrb[0].mxu0 %v765
        %v835 = vpop.f32.mrb[0].mxu0
        %v836 = vadd.f32 0.0, %v835
        %v837 = vpop.f32.mrb[0].mxu0
        %838 = vdwg.mxu0
        %v840 = vsel %vm507, %v758, 0
        %v842 = vsel %vm511, %v757, 0
        %844 = vmatprep.subr.mxu0 0.0
        %845 = vmatpush1.msra.mxu0 %v842
        %846 = vmatprep.subr.mxu0 0.0
        %847 = vmatpush1.msra.mxu0 0.0
        %848 = vmatprep.subr.mxu0 0.0
        %849 = vmatpush1.msra.mxu0 0.0
        %850 = vmatprep.subr.mxu0 0.0
        %851 = vmatpush1.msra.mxu0 0.0
        %852 = vmatprep.subr.mxu0 0.0
        %853 = vmatpush1.msra.mxu0 0.0
        %854 = vmatprep.subr.mxu0 0.0
        %855 = vmatpush1.msra.mxu0 0.0
        %856 = vmatprep.subr.mxu0 0.0
        %857 = vmatpush1.msra.mxu0 0.0
        %858 = vmatprep.subr.mxu0 0.0
        %859 = vmatpush1.msra.mxu0 0.0
        %860 = vmatprep.subr.mxu0 0.0
        %861 = vmatpush1.msra.mxu0 0.0
        %862 = vmatprep.subr.mxu0 0.0
        %863 = vmatpush1.msra.mxu0 0.0
        %864 = vmatprep.subr.mxu0 0.0
        %865 = vmatpush1.msra.mxu0 0.0
        %866 = vmatprep.subr.mxu0 0.0
        %867 = vmatpush1.msra.mxu0 0.0
        %868 = vmatprep.subr.mxu0 0.0
        %869 = vmatpush1.msra.mxu0 0.0
        %870 = vmatprep.subr.mxu0 0.0
        %871 = vmatpush1.msra.mxu0 0.0
        %872 = vmatprep.subr.mxu0 0.0
        %873 = vmatpush1.msra.mxu0 0.0
        %874 = vmatprep.subr.mxu0 0.0
        %875 = vmatpush1.msra.mxu0 0.0
        %876 = vmatprep.subr.mxu0 0.0
        %877 = vmatpush1.msra.mxu0 0.0
        %878 = vmatprep.subr.mxu0 0.0
        %879 = vmatpush1.msra.mxu0 0.0
        %880 = vmatprep.subr.mxu0 0.0
        %881 = vmatpush1.msra.mxu0 0.0
        %882 = vmatprep.subr.mxu0 0.0
        %883 = vmatpush1.msra.mxu0 0.0
        %884 = vmatprep.subr.mxu0 0.0
        %885 = vmatpush1.msra.mxu0 0.0
        %886 = vmatprep.subr.mxu0 0.0
        %887 = vmatpush1.msra.mxu0 0.0
        %888 = vmatprep.subr.mxu0 0.0
        %889 = vmatpush1.msra.mxu0 0.0
        %890 = vmatprep.subr.mxu0 0.0
        %891 = vmatpush1.msra.mxu0 0.0
        %892 = vmatprep.subr.mxu0 0.0
        %893 = vmatpush1.msra.mxu0 0.0
        %894 = vmatprep.subr.mxu0 0.0
        %895 = vmatpush1.msra.mxu0 0.0
        %896 = vmatprep.subr.mxu0 0.0
        %897 = vmatpush1.msra.mxu0 0.0
        %898 = vmatprep.subr.mxu0 0.0
        %899 = vmatpush1.msra.mxu0 0.0
        %900 = vmatprep.subr.mxu0 0.0
        %901 = vmatpush1.msra.mxu0 0.0
        %902 = vmatprep.subr.mxu0 0.0
        %903 = vmatpush1.msra.mxu0 0.0
        %904 = vmatprep.subr.mxu0 0.0
        %905 = vmatpush1.msra.mxu0 0.0
        %906 = vmatprep.subr.mxu0 0.0
        %907 = vmatpush1.msra.mxu0 0.0
        %908 = vmatprep.mubr.f32.mxu0 0.0
        %909 = vmatmul.mubr.f32.gmra.mrb[0].mxu0 %v840
        %v910 = vpop.f32.mrb[0].mxu0
        %v911 = vadd.f32 %v836, %v910
        %v912 = vpop.f32.mrb[0].mxu0
        %913 = vdwg.mxu0
        %s914 = scalar_lea.vmem %s3, 8
        %v915 = vld [vmem:[%s914] sm:$0xf]
        %916 = vrot.lane.b32.xlu0 %v757, 126
        %v917 = vpop.permute.xlu0 %916
        %v919 = vsel %vm507, %v915, 0
        %v921 = vsel %vm511, %v917, 0
        %923 = vmatprep.subr.mxu0 0.0
        %924 = vmatpush1.msra.mxu0 %v921
        %925 = vmatprep.subr.mxu0 0.0
        %926 = vmatpush1.msra.mxu0 0.0
        %927 = vmatprep.subr.mxu0 0.0
        %928 = vmatpush1.msra.mxu0 0.0
        %929 = vmatprep.subr.mxu0 0.0
        %930 = vmatpush1.msra.mxu0 0.0
        %931 = vmatprep.subr.mxu0 0.0
        %932 = vmatpush1.msra.mxu0 0.0
        %933 = vmatprep.subr.mxu0 0.0
        %934 = vmatpush1.msra.mxu0 0.0
        %935 = vmatprep.subr.mxu0 0.0
        %936 = vmatpush1.msra.mxu0 0.0
        %937 = vmatprep.subr.mxu0 0.0
        %938 = vmatpush1.msra.mxu0 0.0
        %939 = vmatprep.subr.mxu0 0.0
        %940 = vmatpush1.msra.mxu0 0.0
        %941 = vmatprep.subr.mxu0 0.0
        %942 = vmatpush1.msra.mxu0 0.0
        %943 = vmatprep.subr.mxu0 0.0
        %944 = vmatpush1.msra.mxu0 0.0
        %945 = vmatprep.subr.mxu0 0.0
        %946 = vmatpush1.msra.mxu0 0.0
        %947 = vmatprep.subr.mxu0 0.0
        %948 = vmatpush1.msra.mxu0 0.0
        %949 = vmatprep.subr.mxu0 0.0
        %950 = vmatpush1.msra.mxu0 0.0
        %951 = vmatprep.subr.mxu0 0.0
        %952 = vmatpush1.msra.mxu0 0.0
        %953 = vmatprep.subr.mxu0 0.0
        %954 = vmatpush1.msra.mxu0 0.0
        %955 = vmatprep.subr.mxu0 0.0
        %956 = vmatpush1.msra.mxu0 0.0
        %957 = vmatprep.subr.mxu0 0.0
        %958 = vmatpush1.msra.mxu0 0.0
        %959 = vmatprep.subr.mxu0 0.0
        %960 = vmatpush1.msra.mxu0 0.0
        %961 = vmatprep.subr.mxu0 0.0
        %962 = vmatpush1.msra.mxu0 0.0
        %963 = vmatprep.subr.mxu0 0.0
        %964 = vmatpush1.msra.mxu0 0.0
        %965 = vmatprep.subr.mxu0 0.0
        %966 = vmatpush1.msra.mxu0 0.0
        %967 = vmatprep.subr.mxu0 0.0
        %968 = vmatpush1.msra.mxu0 0.0
        %969 = vmatprep.subr.mxu0 0.0
        %970 = vmatpush1.msra.mxu0 0.0
        %971 = vmatprep.subr.mxu0 0.0
        %972 = vmatpush1.msra.mxu0 0.0
        %973 = vmatprep.subr.mxu0 0.0
        %974 = vmatpush1.msra.mxu0 0.0
        %975 = vmatprep.subr.mxu0 0.0
        %976 = vmatpush1.msra.mxu0 0.0
        %977 = vmatprep.subr.mxu0 0.0
        %978 = vmatpush1.msra.mxu0 0.0
        %979 = vmatprep.subr.mxu0 0.0
        %980 = vmatpush1.msra.mxu0 0.0
        %981 = vmatprep.subr.mxu0 0.0
        %982 = vmatpush1.msra.mxu0 0.0
        %983 = vmatprep.subr.mxu0 0.0
        %984 = vmatpush1.msra.mxu0 0.0
        %985 = vmatprep.subr.mxu0 0.0
        %986 = vmatpush1.msra.mxu0 0.0
        %987 = vmatprep.mubr.f32.mxu0 0.0
        %988 = vmatmul.mubr.f32.gmra.mrb[0].mxu0 %v919
        %v989 = vpop.f32.mrb[0].mxu0
        %v990 = vadd.f32 0.0, %v989
        %v991 = vpop.f32.mrb[0].mxu0
        %992 = vdwg.mxu0
        %v993 = vadd.f32 %v911, %v990
        %v994 = vld [vmem:[%s4] sm:$0xf]
        %996 = vset.pattern.permute.xlu0 0
        %997 = vperm.xlu0 %996, %v994
        %v998 = vpop.permute.xlu0 %997
        %v1000 = vadd.f32 %v993, %v998
        %vm1001 = vcmp.gt.f32.partialorder %v1000, 0.0
        %v1002 = vmul.f32 %v1000, 0.1
        %v1003 = vsel %vm1001, %v1000, %v1002
        %1005 = vrot.lane.b32.xlu0 %v1003, 2
        %v1006 = vpop.permute.xlu0 %1005
        %v1008 = vadd.f32 %v488, %v1006
        %s1009 = ssub.s32 %s489, 16
        %v1010 = vstv %s1009
        %v1011 = vadd.s32 %v1010, %v492
        %vm1012 = vcmp.ge.s32.totalorder %v1011, 0
        %vm1013 = vcmp.lt.s32.totalorder %v1011, 16
        %vm1014 = vmand %vm1012, %vm1013
        %v1015 = vsel %vm1014, 1, 0
        %vm1016 = vcmp.eq.s32.totalorder %v1015, 1
        %1018 = vrot.lane.b32.xlu0 %v1008, 126
        %v1019 = vpop.permute.xlu0 %1018
        %v1021 = vsel %vm1016, %v1019, 0.0
        %v1022 = vld [vmem:[%s5] sm:$0xf]
        %s1023 = scalar_lea.vmem %s5, 4
        %v1024 = vld [vmem:[%s1023] sm:$0xf]
        %1026 = vrot.lane.b32.xlu0 %v1021, 125
        %v1027 = vpop.permute.xlu0 %1026
        %v1029 = vsel %vm507, %v1024, 0
        %v1031 = vsel %vm511, %v1027, 0
        %1033 = vmatprep.subr.mxu0 0.0
        %1034 = vmatpush1.msra.mxu0 %v1031
        %1035 = vmatprep.subr.mxu0 0.0
        %1036 = vmatpush1.msra.mxu0 0.0
        %1037 = vmatprep.subr.mxu0 0.0
        %1038 = vmatpush1.msra.mxu0 0.0
        %1039 = vmatprep.subr.mxu0 0.0
        %1040 = vmatpush1.msra.mxu0 0.0
        %1041 = vmatprep.subr.mxu0 0.0
        %1042 = vmatpush1.msra.mxu0 0.0
        %1043 = vmatprep.subr.mxu0 0.0
        %1044 = vmatpush1.msra.mxu0 0.0
        %1045 = vmatprep.subr.mxu0 0.0
        %1046 = vmatpush1.msra.mxu0 0.0
        %1047 = vmatprep.subr.mxu0 0.0
        %1048 = vmatpush1.msra.mxu0 0.0
        %1049 = vmatprep.subr.mxu0 0.0
        %1050 = vmatpush1.msra.mxu0 0.0
        %1051 = vmatprep.subr.mxu0 0.0
        %1052 = vmatpush1.msra.mxu0 0.0
        %1053 = vmatprep.subr.mxu0 0.0
        %1054 = vmatpush1.msra.mxu0 0.0
        %1055 = vmatprep.subr.mxu0 0.0
        %1056 = vmatpush1.msra.mxu0 0.0
        %1057 = vmatprep.subr.mxu0 0.0
        %1058 = vmatpush1.msra.mxu0 0.0
        %1059 = vmatprep.subr.mxu0 0.0
        %1060 = vmatpush1.msra.mxu0 0.0
        %1061 = vmatprep.subr.mxu0 0.0
        %1062 = vmatpush1.msra.mxu0 0.0
        %1063 = vmatprep.subr.mxu0 0.0
        %1064 = vmatpush1.msra.mxu0 0.0
        %1065 = vmatprep.subr.mxu0 0.0
        %1066 = vmatpush1.msra.mxu0 0.0
        %1067 = vmatprep.subr.mxu0 0.0
        %1068 = vmatpush1.msra.mxu0 0.0
        %1069 = vmatprep.subr.mxu0 0.0
        %1070 = vmatpush1.msra.mxu0 0.0
        %1071 = vmatprep.subr.mxu0 0.0
        %1072 = vmatpush1.msra.mxu0 0.0
        %1073 = vmatprep.subr.mxu0 0.0
        %1074 = vmatpush1.msra.mxu0 0.0
        %1075 = vmatprep.subr.mxu0 0.0
        %1076 = vmatpush1.msra.mxu0 0.0
        %1077 = vmatprep.subr.mxu0 0.0
        %1078 = vmatpush1.msra.mxu0 0.0
        %1079 = vmatprep.subr.mxu0 0.0
        %1080 = vmatpush1.msra.mxu0 0.0
        %1081 = vmatprep.subr.mxu0 0.0
        %1082 = vmatpush1.msra.mxu0 0.0
        %1083 = vmatprep.subr.mxu0 0.0
        %1084 = vmatpush1.msra.mxu0 0.0
        %1085 = vmatprep.subr.mxu0 0.0
        %1086 = vmatpush1.msra.mxu0 0.0
        %1087 = vmatprep.subr.mxu0 0.0
        %1088 = vmatpush1.msra.mxu0 0.0
        %1089 = vmatprep.subr.mxu0 0.0
        %1090 = vmatpush1.msra.mxu0 0.0
        %1091 = vmatprep.subr.mxu0 0.0
        %1092 = vmatpush1.msra.mxu0 0.0
        %1093 = vmatprep.subr.mxu0 0.0
        %1094 = vmatpush1.msra.mxu0 0.0
        %1095 = vmatprep.subr.mxu0 0.0
        %1096 = vmatpush1.msra.mxu0 0.0
        %1097 = vmatprep.mubr.f32.mxu0 0.0
        %1098 = vmatmul.mubr.f32.gmra.mrb[0].mxu0 %v1029
        %v1099 = vpop.f32.mrb[0].mxu0
        %v1100 = vadd.f32 0.0, %v1099
        %v1101 = vpop.f32.mrb[0].mxu0
        %1102 = vdwg.mxu0
        %v1104 = vsel %vm507, %v1022, 0
        %v1106 = vsel %vm511, %v1021, 0
        %1108 = vmatprep.subr.mxu0 0.0
        %1109 = vmatpush1.msra.mxu0 %v1106
        %1110 = vmatprep.subr.mxu0 0.0
        %1111 = vmatpush1.msra.mxu0 0.0
        %1112 = vmatprep.subr.mxu0 0.0
        %1113 = vmatpush1.msra.mxu0 0.0
        %1114 = vmatprep.subr.mxu0 0.0
        %1115 = vmatpush1.msra.mxu0 0.0
        %1116 = vmatprep.subr.mxu0 0.0
        %1117 = vmatpush1.msra.mxu0 0.0
        %1118 = vmatprep.subr.mxu0 0.0
        %1119 = vmatpush1.msra.mxu0 0.0
        %1120 = vmatprep.subr.mxu0 0.0
        %1121 = vmatpush1.msra.mxu0 0.0
        %1122 = vmatprep.subr.mxu0 0.0
        %1123 = vmatpush1.msra.mxu0 0.0
        %1124 = vmatprep.subr.mxu0 0.0
        %1125 = vmatpush1.msra.mxu0 0.0
        %1126 = vmatprep.subr.mxu0 0.0
        %1127 = vmatpush1.msra.mxu0 0.0
        %1128 = vmatprep.subr.mxu0 0.0
        %1129 = vmatpush1.msra.mxu0 0.0
        %1130 = vmatprep.subr.mxu0 0.0
        %1131 = vmatpush1.msra.mxu0 0.0
        %1132 = vmatprep.subr.mxu0 0.0
        %1133 = vmatpush1.msra.mxu0 0.0
        %1134 = vmatprep.subr.mxu0 0.0
        %1135 = vmatpush1.msra.mxu0 0.0
        %1136 = vmatprep.subr.mxu0 0.0
        %1137 = vmatpush1.msra.mxu0 0.0
        %1138 = vmatprep.subr.mxu0 0.0
        %1139 = vmatpush1.msra.mxu0 0.0
        %1140 = vmatprep.subr.mxu0 0.0
        %1141 = vmatpush1.msra.mxu0 0.0
        %1142 = vmatprep.subr.mxu0 0.0
        %1143 = vmatpush1.msra.mxu0 0.0
        %1144 = vmatprep.subr.mxu0 0.0
        %1145 = vmatpush1.msra.mxu0 0.0
        %1146 = vmatprep.subr.mxu0 0.0
        %1147 = vmatpush1.msra.mxu0 0.0
        %1148 = vmatprep.subr.mxu0 0.0
        %1149 = vmatpush1.msra.mxu0 0.0
        %1150 = vmatprep.subr.mxu0 0.0
        %1151 = vmatpush1.msra.mxu0 0.0
        %1152 = vmatprep.subr.mxu0 0.0
        %1153 = vmatpush1.msra.mxu0 0.0
        %1154 = vmatprep.subr.mxu0 0.0
        %1155 = vmatpush1.msra.mxu0 0.0
        %1156 = vmatprep.subr.mxu0 0.0
        %1157 = vmatpush1.msra.mxu0 0.0
        %1158 = vmatprep.subr.mxu0 0.0
        %1159 = vmatpush1.msra.mxu0 0.0
        %1160 = vmatprep.subr.mxu0 0.0
        %1161 = vmatpush1.msra.mxu0 0.0
        %1162 = vmatprep.subr.mxu0 0.0
        %1163 = vmatpush1.msra.mxu0 0.0
        %1164 = vmatprep.subr.mxu0 0.0
        %1165 = vmatpush1.msra.mxu0 0.0
        %1166 = vmatprep.subr.mxu0 0.0
        %1167 = vmatpush1.msra.mxu0 0.0
        %1168 = vmatprep.subr.mxu0 0.0
        %1169 = vmatpush1.msra.mxu0 0.0
        %1170 = vmatprep.subr.mxu0 0.0
        %1171 = vmatpush1.msra.mxu0 0.0
        %1172 = vmatprep.mubr.f32.mxu0 0.0
        %1173 = vmatmul.mubr.f32.gmra.mrb[0].mxu0 %v1104
        %v1174 = vpop.f32.mrb[0].mxu0
        %v1175 = vadd.f32 %v1100, %v1174
        %v1176 = vpop.f32.mrb[0].mxu0
        %1177 = vdwg.mxu0
        %s1178 = scalar_lea.vmem %s5, 8
        %v1179 = vld [vmem:[%s1178] sm:$0xf]
        %1180 = vrot.lane.b32.xlu0 %v1021, 122
        %v1181 = vpop.permute.xlu0 %1180
        %v1183 = vsel %vm507, %v1179, 0
        %v1185 = vsel %vm511, %v1181, 0
        %1187 = vmatprep.subr.mxu0 0.0
        %1188 = vmatpush1.msra.mxu0 %v1185
        %1189 = vmatprep.subr.mxu0 0.0
        %1190 = vmatpush1.msra.mxu0 0.0
        %1191 = vmatprep.subr.mxu0 0.0
        %1192 = vmatpush1.msra.mxu0 0.0
        %1193 = vmatprep.subr.mxu0 0.0
        %1194 = vmatpush1.msra.mxu0 0.0
        %1195 = vmatprep.subr.mxu0 0.0
        %1196 = vmatpush1.msra.mxu0 0.0
        %1197 = vmatprep.subr.mxu0 0.0
        %1198 = vmatpush1.msra.mxu0 0.0
        %1199 = vmatprep.subr.mxu0 0.0
        %1200 = vmatpush1.msra.mxu0 0.0
        %1201 = vmatprep.subr.mxu0 0.0
        %1202 = vmatpush1.msra.mxu0 0.0
        %1203 = vmatprep.subr.mxu0 0.0
        %1204 = vmatpush1.msra.mxu0 0.0
        %1205 = vmatprep.subr.mxu0 0.0
        %1206 = vmatpush1.msra.mxu0 0.0
        %1207 = vmatprep.subr.mxu0 0.0
        %1208 = vmatpush1.msra.mxu0 0.0
        %1209 = vmatprep.subr.mxu0 0.0
        %1210 = vmatpush1.msra.mxu0 0.0
        %1211 = vmatprep.subr.mxu0 0.0
        %1212 = vmatpush1.msra.mxu0 0.0
        %1213 = vmatprep.subr.mxu0 0.0
        %1214 = vmatpush1.msra.mxu0 0.0
        %1215 = vmatprep.subr.mxu0 0.0
        %1216 = vmatpush1.msra.mxu0 0.0
        %1217 = vmatprep.subr.mxu0 0.0
        %1218 = vmatpush1.msra.mxu0 0.0
        %1219 = vmatprep.subr.mxu0 0.0
        %1220 = vmatpush1.msra.mxu0 0.0
        %1221 = vmatprep.subr.mxu0 0.0
        %1222 = vmatpush1.msra.mxu0 0.0
        %1223 = vmatprep.subr.mxu0 0.0
        %1224 = vmatpush1.msra.mxu0 0.0
        %1225 = vmatprep.subr.mxu0 0.0
        %1226 = vmatpush1.msra.mxu0 0.0
        %1227 = vmatprep.subr.mxu0 0.0
        %1228 = vmatpush1.msra.mxu0 0.0
        %1229 = vmatprep.subr.mxu0 0.0
        %1230 = vmatpush1.msra.mxu0 0.0
        %1231 = vmatprep.subr.mxu0 0.0
        %1232 = vmatpush1.msra.mxu0 0.0
        %1233 = vmatprep.subr.mxu0 0.0
        %1234 = vmatpush1.msra.mxu0 0.0
        %1235 = vmatprep.subr.mxu0 0.0
        %1236 = vmatpush1.msra.mxu0 0.0
        %1237 = vmatprep.subr.mxu0 0.0
        %1238 = vmatpush1.msra.mxu0 0.0
        %1239 = vmatprep.subr.mxu0 0.0
        %1240 = vmatpush1.msra.mxu0 0.0
        %1241 = vmatprep.subr.mxu0 0.0
        %1242 = vmatpush1.msra.mxu0 0.0
        %1243 = vmatprep.subr.mxu0 0.0
        %1244 = vmatpush1.msra.mxu0 0.0
        %1245 = vmatprep.subr.mxu0 0.0
        %1246 = vmatpush1.msra.mxu0 0.0
        %1247 = vmatprep.subr.mxu0 0.0
        %1248 = vmatpush1.msra.mxu0 0.0
        %1249 = vmatprep.subr.mxu0 0.0
        %1250 = vmatpush1.msra.mxu0 0.0
        %1251 = vmatprep.mubr.f32.mxu0 0.0
        %1252 = vmatmul.mubr.f32.gmra.mrb[0].mxu0 %v1183
        %v1253 = vpop.f32.mrb[0].mxu0
        %v1254 = vadd.f32 0.0, %v1253
        %v1255 = vpop.f32.mrb[0].mxu0
        %1256 = vdwg.mxu0
        %v1257 = vadd.f32 %v1175, %v1254
        %v1258 = vld [vmem:[%s6] sm:$0xf]
        %1260 = vset.pattern.permute.xlu0 0
        %1261 = vperm.xlu0 %1260, %v1258
        %v1262 = vpop.permute.xlu0 %1261
        %v1264 = vadd.f32 %v1257, %v1262
        %vm1265 = vcmp.gt.f32.partialorder %v1264, 0.0
        %v1266 = vmul.f32 %v1264, 0.1
        %v1267 = vsel %vm1265, %v1264, %v1266
        %s1268 = sadd.s32 %s489, 4294967283
        %v1269 = vstv %s1268
        %v1270 = vadd.s32 %v1269, %v492
        %vm1271 = vcmp.ge.s32.totalorder %v1270, 0
        %vm1272 = vcmp.lt.s32.totalorder %v1270, 16
        %vm1273 = vmand %vm1271, %vm1272
        %v1274 = vsel %vm1273, 1, 0
        %vm1275 = vcmp.eq.s32.totalorder %v1274, 1
        %v1276 = vsel %vm1275, %v1267, 0.0
        %v1277 = vld [vmem:[%s7] sm:$0xf]
        %s1278 = scalar_lea.vmem %s7, 4
        %v1279 = vld [vmem:[%s1278] sm:$0xf]
        %1281 = vrot.lane.b32.xlu0 %v1276, 125
        %v1282 = vpop.permute.xlu0 %1281
        %v1284 = vsel %vm507, %v1279, 0
        %v1286 = vsel %vm511, %v1282, 0
        %1288 = vmatprep.subr.mxu0 0.0
        %1289 = vmatpush1.msra.mxu0 %v1286
        %1290 = vmatprep.subr.mxu0 0.0
        %1291 = vmatpush1.msra.mxu0 0.0
        %1292 = vmatprep.subr.mxu0 0.0
        %1293 = vmatpush1.msra.mxu0 0.0
        %1294 = vmatprep.subr.mxu0 0.0
        %1295 = vmatpush1.msra.mxu0 0.0
        %1296 = vmatprep.subr.mxu0 0.0
        %1297 = vmatpush1.msra.mxu0 0.0
        %1298 = vmatprep.subr.mxu0 0.0
        %1299 = vmatpush1.msra.mxu0 0.0
        %1300 = vmatprep.subr.mxu0 0.0
        %1301 = vmatpush1.msra.mxu0 0.0
        %1302 = vmatprep.subr.mxu0 0.0
        %1303 = vmatpush1.msra.mxu0 0.0
        %1304 = vmatprep.subr.mxu0 0.0
        %1305 = vmatpush1.msra.mxu0 0.0
        %1306 = vmatprep.subr.mxu0 0.0
        %1307 = vmatpush1.msra.mxu0 0.0
        %1308 = vmatprep.subr.mxu0 0.0
        %1309 = vmatpush1.msra.mxu0 0.0
        %1310 = vmatprep.subr.mxu0 0.0
        %1311 = vmatpush1.msra.mxu0 0.0
        %1312 = vmatprep.subr.mxu0 0.0
        %1313 = vmatpush1.msra.mxu0 0.0
        %1314 = vmatprep.subr.mxu0 0.0
        %1315 = vmatpush1.msra.mxu0 0.0
        %1316 = vmatprep.subr.mxu0 0.0
        %1317 = vmatpush1.msra.mxu0 0.0
        %1318 = vmatprep.subr.mxu0 0.0
        %1319 = vmatpush1.msra.mxu0 0.0
        %1320 = vmatprep.subr.mxu0 0.0
        %1321 = vmatpush1.msra.mxu0 0.0
        %1322 = vmatprep.subr.mxu0 0.0
        %1323 = vmatpush1.msra.mxu0 0.0
        %1324 = vmatprep.subr.mxu0 0.0
        %1325 = vmatpush1.msra.mxu0 0.0
        %1326 = vmatprep.subr.mxu0 0.0
        %1327 = vmatpush1.msra.mxu0 0.0
        %1328 = vmatprep.subr.mxu0 0.0
        %1329 = vmatpush1.msra.mxu0 0.0
        %1330 = vmatprep.subr.mxu0 0.0
        %1331 = vmatpush1.msra.mxu0 0.0
        %1332 = vmatprep.subr.mxu0 0.0
        %1333 = vmatpush1.msra.mxu0 0.0
        %1334 = vmatprep.subr.mxu0 0.0
        %1335 = vmatpush1.msra.mxu0 0.0
        %1336 = vmatprep.subr.mxu0 0.0
        %1337 = vmatpush1.msra.mxu0 0.0
        %1338 = vmatprep.subr.mxu0 0.0
        %1339 = vmatpush1.msra.mxu0 0.0
        %1340 = vmatprep.subr.mxu0 0.0
        %1341 = vmatpush1.msra.mxu0 0.0
        %1342 = vmatprep.subr.mxu0 0.0
        %1343 = vmatpush1.msra.mxu0 0.0
        %1344 = vmatprep.subr.mxu0 0.0
        %1345 = vmatpush1.msra.mxu0 0.0
        %1346 = vmatprep.subr.mxu0 0.0
        %1347 = vmatpush1.msra.mxu0 0.0
        %1348 = vmatprep.subr.mxu0 0.0
        %1349 = vmatpush1.msra.mxu0 0.0
        %1350 = vmatprep.subr.mxu0 0.0
        %1351 = vmatpush1.msra.mxu0 0.0
        %1352 = vmatprep.mubr.f32.mxu0 0.0
        %1353 = vmatmul.mubr.f32.gmra.mrb[0].mxu0 %v1284
        %v1354 = vpop.f32.mrb[0].mxu0
        %v1355 = vadd.f32 0.0, %v1354
        %v1356 = vpop.f32.mrb[0].mxu0
        %1357 = vdwg.mxu0
        %v1359 = vsel %vm507, %v1277, 0
        %v1361 = vsel %vm511, %v1276, 0
        %1363 = vmatprep.subr.mxu0 0.0
        %1364 = vmatpush1.msra.mxu0 %v1361
        %1365 = vmatprep.subr.mxu0 0.0
        %1366 = vmatpush1.msra.mxu0 0.0
        %1367 = vmatprep.subr.mxu0 0.0
        %1368 = vmatpush1.msra.mxu0 0.0
        %1369 = vmatprep.subr.mxu0 0.0
        %1370 = vmatpush1.msra.mxu0 0.0
        %1371 = vmatprep.subr.mxu0 0.0
        %1372 = vmatpush1.msra.mxu0 0.0
        %1373 = vmatprep.subr.mxu0 0.0
        %1374 = vmatpush1.msra.mxu0 0.0
        %1375 = vmatprep.subr.mxu0 0.0
        %1376 = vmatpush1.msra.mxu0 0.0
        %1377 = vmatprep.subr.mxu0 0.0
        %1378 = vmatpush1.msra.mxu0 0.0
        %1379 = vmatprep.subr.mxu0 0.0
        %1380 = vmatpush1.msra.mxu0 0.0
        %1381 = vmatprep.subr.mxu0 0.0
        %1382 = vmatpush1.msra.mxu0 0.0
        %1383 = vmatprep.subr.mxu0 0.0
        %1384 = vmatpush1.msra.mxu0 0.0
        %1385 = vmatprep.subr.mxu0 0.0
        %1386 = vmatpush1.msra.mxu0 0.0
        %1387 = vmatprep.subr.mxu0 0.0
        %1388 = vmatpush1.msra.mxu0 0.0
        %1389 = vmatprep.subr.mxu0 0.0
        %1390 = vmatpush1.msra.mxu0 0.0
        %1391 = vmatprep.subr.mxu0 0.0
        %1392 = vmatpush1.msra.mxu0 0.0
        %1393 = vmatprep.subr.mxu0 0.0
        %1394 = vmatpush1.msra.mxu0 0.0
        %1395 = vmatprep.subr.mxu0 0.0
        %1396 = vmatpush1.msra.mxu0 0.0
        %1397 = vmatprep.subr.mxu0 0.0
        %1398 = vmatpush1.msra.mxu0 0.0
        %1399 = vmatprep.subr.mxu0 0.0
        %1400 = vmatpush1.msra.mxu0 0.0
        %1401 = vmatprep.subr.mxu0 0.0
        %1402 = vmatpush1.msra.mxu0 0.0
        %1403 = vmatprep.subr.mxu0 0.0
        %1404 = vmatpush1.msra.mxu0 0.0
        %1405 = vmatprep.subr.mxu0 0.0
        %1406 = vmatpush1.msra.mxu0 0.0
        %1407 = vmatprep.subr.mxu0 0.0
        %1408 = vmatpush1.msra.mxu0 0.0
        %1409 = vmatprep.subr.mxu0 0.0
        %1410 = vmatpush1.msra.mxu0 0.0
        %1411 = vmatprep.subr.mxu0 0.0
        %1412 = vmatpush1.msra.mxu0 0.0
        %1413 = vmatprep.subr.mxu0 0.0
        %1414 = vmatpush1.msra.mxu0 0.0
        %1415 = vmatprep.subr.mxu0 0.0
        %1416 = vmatpush1.msra.mxu0 0.0
        %1417 = vmatprep.subr.mxu0 0.0
        %1418 = vmatpush1.msra.mxu0 0.0
        %1419 = vmatprep.subr.mxu0 0.0
        %1420 = vmatpush1.msra.mxu0 0.0
        %1421 = vmatprep.subr.mxu0 0.0
        %1422 = vmatpush1.msra.mxu0 0.0
        %1423 = vmatprep.subr.mxu0 0.0
        %1424 = vmatpush1.msra.mxu0 0.0
        %1425 = vmatprep.subr.mxu0 0.0
        %1426 = vmatpush1.msra.mxu0 0.0
        %1427 = vmatprep.mubr.f32.mxu0 0.0
        %1428 = vmatmul.mubr.f32.gmra.mrb[0].mxu0 %v1359
        %v1429 = vpop.f32.mrb[0].mxu0
        %v1430 = vadd.f32 %v1355, %v1429
        %v1431 = vpop.f32.mrb[0].mxu0
        %1432 = vdwg.mxu0
        %s1433 = scalar_lea.vmem %s7, 8
        %v1434 = vld [vmem:[%s1433] sm:$0xf]
        %1435 = vrot.lane.b32.xlu0 %v1276, 122
        %v1436 = vpop.permute.xlu0 %1435
        %v1438 = vsel %vm507, %v1434, 0
        %v1440 = vsel %vm511, %v1436, 0
        %1442 = vmatprep.subr.mxu0 0.0
        %1443 = vmatpush1.msra.mxu0 %v1440
        %1444 = vmatprep.subr.mxu0 0.0
        %1445 = vmatpush1.msra.mxu0 0.0
        %1446 = vmatprep.subr.mxu0 0.0
        %1447 = vmatpush1.msra.mxu0 0.0
        %1448 = vmatprep.subr.mxu0 0.0
        %1449 = vmatpush1.msra.mxu0 0.0
        %1450 = vmatprep.subr.mxu0 0.0
        %1451 = vmatpush1.msra.mxu0 0.0
        %1452 = vmatprep.subr.mxu0 0.0
        %1453 = vmatpush1.msra.mxu0 0.0
        %1454 = vmatprep.subr.mxu0 0.0
        %1455 = vmatpush1.msra.mxu0 0.0
        %1456 = vmatprep.subr.mxu0 0.0
        %1457 = vmatpush1.msra.mxu0 0.0
        %1458 = vmatprep.subr.mxu0 0.0
        %1459 = vmatpush1.msra.mxu0 0.0
        %1460 = vmatprep.subr.mxu0 0.0
        %1461 = vmatpush1.msra.mxu0 0.0
        %1462 = vmatprep.subr.mxu0 0.0
        %1463 = vmatpush1.msra.mxu0 0.0
        %1464 = vmatprep.subr.mxu0 0.0
        %1465 = vmatpush1.msra.mxu0 0.0
        %1466 = vmatprep.subr.mxu0 0.0
        %1467 = vmatpush1.msra.mxu0 0.0
        %1468 = vmatprep.subr.mxu0 0.0
        %1469 = vmatpush1.msra.mxu0 0.0
        %1470 = vmatprep.subr.mxu0 0.0
        %1471 = vmatpush1.msra.mxu0 0.0
        %1472 = vmatprep.subr.mxu0 0.0
        %1473 = vmatpush1.msra.mxu0 0.0
        %1474 = vmatprep.subr.mxu0 0.0
        %1475 = vmatpush1.msra.mxu0 0.0
        %1476 = vmatprep.subr.mxu0 0.0
        %1477 = vmatpush1.msra.mxu0 0.0
        %1478 = vmatprep.subr.mxu0 0.0
        %1479 = vmatpush1.msra.mxu0 0.0
        %1480 = vmatprep.subr.mxu0 0.0
        %1481 = vmatpush1.msra.mxu0 0.0
        %1482 = vmatprep.subr.mxu0 0.0
        %1483 = vmatpush1.msra.mxu0 0.0
        %1484 = vmatprep.subr.mxu0 0.0
        %1485 = vmatpush1.msra.mxu0 0.0
        %1486 = vmatprep.subr.mxu0 0.0
        %1487 = vmatpush1.msra.mxu0 0.0
        %1488 = vmatprep.subr.mxu0 0.0
        %1489 = vmatpush1.msra.mxu0 0.0
        %1490 = vmatprep.subr.mxu0 0.0
        %1491 = vmatpush1.msra.mxu0 0.0
        %1492 = vmatprep.subr.mxu0 0.0
        %1493 = vmatpush1.msra.mxu0 0.0
        %1494 = vmatprep.subr.mxu0 0.0
        %1495 = vmatpush1.msra.mxu0 0.0
        %1496 = vmatprep.subr.mxu0 0.0
        %1497 = vmatpush1.msra.mxu0 0.0
        %1498 = vmatprep.subr.mxu0 0.0
        %1499 = vmatpush1.msra.mxu0 0.0
        %1500 = vmatprep.subr.mxu0 0.0
        %1501 = vmatpush1.msra.mxu0 0.0
        %1502 = vmatprep.subr.mxu0 0.0
        %1503 = vmatpush1.msra.mxu0 0.0
        %1504 = vmatprep.subr.mxu0 0.0
        %1505 = vmatpush1.msra.mxu0 0.0
        %1506 = vmatprep.mubr.f32.mxu0 0.0
        %1507 = vmatmul.mubr.f32.gmra.mrb[0].mxu0 %v1438
        %v1508 = vpop.f32.mrb[0].mxu0
        %v1509 = vadd.f32 0.0, %v1508
        %v1510 = vpop.f32.mrb[0].mxu0
        %1511 = vdwg.mxu0
        %v1512 = vadd.f32 %v1430, %v1509
        %v1513 = vld [vmem:[%s8] sm:$0xf]
        %1515 = vset.pattern.permute.xlu0 0
        %1516 = vperm.xlu0 %1515, %v1513
        %v1517 = vpop.permute.xlu0 %1516
        %v1519 = vadd.f32 %v1512, %v1517
        %vm1520 = vcmp.gt.f32.partialorder %v1519, 0.0
        %v1521 = vmul.f32 %v1519, 0.1
        %v1522 = vsel %vm1520, %v1519, %v1521
        %1524 = vrot.lane.b32.xlu0 %v1522, 8
        %v1525 = vpop.permute.xlu0 %1524
        %v1527 = vadd.f32 %v1008, %v1525
        %s1528 = ssub.s32 %s489, 10
        %v1529 = vstv %s1528
        %v1530 = vadd.s32 %v1529, %v492
        %vm1531 = vcmp.ge.s32.totalorder %v1530, 0
        %vm1532 = vcmp.lt.s32.totalorder %v1530, 16
        %vm1533 = vmand %vm1531, %vm1532
        %v1534 = vsel %vm1533, 1, 0
        %vm1535 = vcmp.eq.s32.totalorder %v1534, 1
        %1537 = vrot.lane.b32.xlu0 %v1527, 120
        %v1538 = vpop.permute.xlu0 %1537
        %v1540 = vsel %vm1535, %v1538, 0.0
        %v1541 = vld [vmem:[%s9] sm:$0xf]
        %s1542 = scalar_lea.vmem %s9, 4
        %v1543 = vld [vmem:[%s1542] sm:$0xf]
        %1545 = vrot.lane.b32.xlu0 %v1540, 123
        %v1546 = vpop.permute.xlu0 %1545
        %v1548 = vsel %vm507, %v1543, 0
        %v1550 = vsel %vm511, %v1546, 0
        %1552 = vmatprep.subr.mxu0 0.0
        %1553 = vmatpush1.msra.mxu0 %v1550
        %1554 = vmatprep.subr.mxu0 0.0
        %1555 = vmatpush1.msra.mxu0 0.0
        %1556 = vmatprep.subr.mxu0 0.0
        %1557 = vmatpush1.msra.mxu0 0.0
        %1558 = vmatprep.subr.mxu0 0.0
        %1559 = vmatpush1.msra.mxu0 0.0
        %1560 = vmatprep.subr.mxu0 0.0
        %1561 = vmatpush1.msra.mxu0 0.0
        %1562 = vmatprep.subr.mxu0 0.0
        %1563 = vmatpush1.msra.mxu0 0.0
        %1564 = vmatprep.subr.mxu0 0.0
        %1565 = vmatpush1.msra.mxu0 0.0
        %1566 = vmatprep.subr.mxu0 0.0
        %1567 = vmatpush1.msra.mxu0 0.0
        %1568 = vmatprep.subr.mxu0 0.0
        %1569 = vmatpush1.msra.mxu0 0.0
        %1570 = vmatprep.subr.mxu0 0.0
        %1571 = vmatpush1.msra.mxu0 0.0
        %1572 = vmatprep.subr.mxu0 0.0
        %1573 = vmatpush1.msra.mxu0 0.0
        %1574 = vmatprep.subr.mxu0 0.0
        %1575 = vmatpush1.msra.mxu0 0.0
        %1576 = vmatprep.subr.mxu0 0.0
        %1577 = vmatpush1.msra.mxu0 0.0
        %1578 = vmatprep.subr.mxu0 0.0
        %1579 = vmatpush1.msra.mxu0 0.0
        %1580 = vmatprep.subr.mxu0 0.0
        %1581 = vmatpush1.msra.mxu0 0.0
        %1582 = vmatprep.subr.mxu0 0.0
        %1583 = vmatpush1.msra.mxu0 0.0
        %1584 = vmatprep.subr.mxu0 0.0
        %1585 = vmatpush1.msra.mxu0 0.0
        %1586 = vmatprep.subr.mxu0 0.0
        %1587 = vmatpush1.msra.mxu0 0.0
        %1588 = vmatprep.subr.mxu0 0.0
        %1589 = vmatpush1.msra.mxu0 0.0
        %1590 = vmatprep.subr.mxu0 0.0
        %1591 = vmatpush1.msra.mxu0 0.0
        %1592 = vmatprep.subr.mxu0 0.0
        %1593 = vmatpush1.msra.mxu0 0.0
        %1594 = vmatprep.subr.mxu0 0.0
        %1595 = vmatpush1.msra.mxu0 0.0
        %1596 = vmatprep.subr.mxu0 0.0
        %1597 = vmatpush1.msra.mxu0 0.0
        %1598 = vmatprep.subr.mxu0 0.0
        %1599 = vmatpush1.msra.mxu0 0.0
        %1600 = vmatprep.subr.mxu0 0.0
        %1601 = vmatpush1.msra.mxu0 0.0
        %1602 = vmatprep.subr.mxu0 0.0
        %1603 = vmatpush1.msra.mxu0 0.0
        %1604 = vmatprep.subr.mxu0 0.0
        %1605 = vmatpush1.msra.mxu0 0.0
        %1606 = vmatprep.subr.mxu0 0.0
        %1607 = vmatpush1.msra.mxu0 0.0
        %1608 = vmatprep.subr.mxu0 0.0
        %1609 = vmatpush1.msra.mxu0 0.0
        %1610 = vmatprep.subr.mxu0 0.0
        %1611 = vmatpush1.msra.mxu0 0.0
        %1612 = vmatprep.subr.mxu0 0.0
        %1613 = vmatpush1.msra.mxu0 0.0
        %1614 = vmatprep.subr.mxu0 0.0
        %1615 = vmatpush1.msra.mxu0 0.0
        %1616 = vmatprep.mubr.f32.mxu0 0.0
        %1617 = vmatmul.mubr.f32.gmra.mrb[0].mxu0 %v1548
        %v1618 = vpop.f32.mrb[0].mxu0
        %v1619 = vadd.f32 0.0, %v1618
        %v1620 = vpop.f32.mrb[0].mxu0
        %1621 = vdwg.mxu0
        %v1623 = vsel %vm507, %v1541, 0
        %v1625 = vsel %vm511, %v1540, 0
        %1627 = vmatprep.subr.mxu0 0.0
        %1628 = vmatpush1.msra.mxu0 %v1625
        %1629 = vmatprep.subr.mxu0 0.0
        %1630 = vmatpush1.msra.mxu0 0.0
        %1631 = vmatprep.subr.mxu0 0.0
        %1632 = vmatpush1.msra.mxu0 0.0
        %1633 = vmatprep.subr.mxu0 0.0
        %1634 = vmatpush1.msra.mxu0 0.0
        %1635 = vmatprep.subr.mxu0 0.0
        %1636 = vmatpush1.msra.mxu0 0.0
        %1637 = vmatprep.subr.mxu0 0.0
        %1638 = vmatpush1.msra.mxu0 0.0
        %1639 = vmatprep.subr.mxu0 0.0
        %1640 = vmatpush1.msra.mxu0 0.0
        %1641 = vmatprep.subr.mxu0 0.0
        %1642 = vmatpush1.msra.mxu0 0.0
        %1643 = vmatprep.subr.mxu0 0.0
        %1644 = vmatpush1.msra.mxu0 0.0
        %1645 = vmatprep.subr.mxu0 0.0
        %1646 = vmatpush1.msra.mxu0 0.0
        %1647 = vmatprep.subr.mxu0 0.0
        %1648 = vmatpush1.msra.mxu0 0.0
        %1649 = vmatprep.subr.mxu0 0.0
        %1650 = vmatpush1.msra.mxu0 0.0
        %1651 = vmatprep.subr.mxu0 0.0
        %1652 = vmatpush1.msra.mxu0 0.0
        %1653 = vmatprep.subr.mxu0 0.0
        %1654 = vmatpush1.msra.mxu0 0.0
        %1655 = vmatprep.subr.mxu0 0.0
        %1656 = vmatpush1.msra.mxu0 0.0
        %1657 = vmatprep.subr.mxu0 0.0
        %1658 = vmatpush1.msra.mxu0 0.0
        %1659 = vmatprep.subr.mxu0 0.0
        %1660 = vmatpush1.msra.mxu0 0.0
        %1661 = vmatprep.subr.mxu0 0.0
        %1662 = vmatpush1.msra.mxu0 0.0
        %1663 = vmatprep.subr.mxu0 0.0
        %1664 = vmatpush1.msra.mxu0 0.0
        %1665 = vmatprep.subr.mxu0 0.0
        %1666 = vmatpush1.msra.mxu0 0.0
        %1667 = vmatprep.subr.mxu0 0.0
        %1668 = vmatpush1.msra.mxu0 0.0
        %1669 = vmatprep.subr.mxu0 0.0
        %1670 = vmatpush1.msra.mxu0 0.0
        %1671 = vmatprep.subr.mxu0 0.0
        %1672 = vmatpush1.msra.mxu0 0.0
        %1673 = vmatprep.subr.mxu0 0.0
        %1674 = vmatpush1.msra.mxu0 0.0
        %1675 = vmatprep.subr.mxu0 0.0
        %1676 = vmatpush1.msra.mxu0 0.0
        %1677 = vmatprep.subr.mxu0 0.0
        %1678 = vmatpush1.msra.mxu0 0.0
        %1679 = vmatprep.subr.mxu0 0.0
        %1680 = vmatpush1.msra.mxu0 0.0
        %1681 = vmatprep.subr.mxu0 0.0
        %1682 = vmatpush1.msra.mxu0 0.0
        %1683 = vmatprep.subr.mxu0 0.0
        %1684 = vmatpush1.msra.mxu0 0.0
        %1685 = vmatprep.subr.mxu0 0.0
        %1686 = vmatpush1.msra.mxu0 0.0
        %1687 = vmatprep.subr.mxu0 0.0
        %1688 = vmatpush1.msra.mxu0 0.0
        %1689 = vmatprep.subr.mxu0 0.0
        %1690 = vmatpush1.msra.mxu0 0.0
        %1691 = vmatprep.mubr.f32.mxu0 0.0
        %1692 = vmatmul.mubr.f32.gmra.mrb[0].mxu0 %v1623
        %v1693 = vpop.f32.mrb[0].mxu0
        %v1694 = vadd.f32 %v1619, %v1693
        %v1695 = vpop.f32.mrb[0].mxu0
        %1696 = vdwg.mxu0
        %s1697 = scalar_lea.vmem %s9, 8
        %v1698 = vld [vmem:[%s1697] sm:$0xf]
        %1699 = vrot.lane.b32.xlu0 %v1540, 118
        %v1700 = vpop.permute.xlu0 %1699
        %v1702 = vsel %vm507, %v1698, 0
        %v1704 = vsel %vm511, %v1700, 0
        %1706 = vmatprep.subr.mxu0 0.0
        %1707 = vmatpush1.msra.mxu0 %v1704
        %1708 = vmatprep.subr.mxu0 0.0
        %1709 = vmatpush1.msra.mxu0 0.0
        %1710 = vmatprep.subr.mxu0 0.0
        %1711 = vmatpush1.msra.mxu0 0.0
        %1712 = vmatprep.subr.mxu0 0.0
        %1713 = vmatpush1.msra.mxu0 0.0
        %1714 = vmatprep.subr.mxu0 0.0
        %1715 = vmatpush1.msra.mxu0 0.0
        %1716 = vmatprep.subr.mxu0 0.0
        %1717 = vmatpush1.msra.mxu0 0.0
        %1718 = vmatprep.subr.mxu0 0.0
        %1719 = vmatpush1.msra.mxu0 0.0
        %1720 = vmatprep.subr.mxu0 0.0
        %1721 = vmatpush1.msra.mxu0 0.0
        %1722 = vmatprep.subr.mxu0 0.0
        %1723 = vmatpush1.msra.mxu0 0.0
        %1724 = vmatprep.subr.mxu0 0.0
        %1725 = vmatpush1.msra.mxu0 0.0
        %1726 = vmatprep.subr.mxu0 0.0
        %1727 = vmatpush1.msra.mxu0 0.0
        %1728 = vmatprep.subr.mxu0 0.0
        %1729 = vmatpush1.msra.mxu0 0.0
        %1730 = vmatprep.subr.mxu0 0.0
        %1731 = vmatpush1.msra.mxu0 0.0
        %1732 = vmatprep.subr.mxu0 0.0
        %1733 = vmatpush1.msra.mxu0 0.0
        %1734 = vmatprep.subr.mxu0 0.0
        %1735 = vmatpush1.msra.mxu0 0.0
        %1736 = vmatprep.subr.mxu0 0.0
        %1737 = vmatpush1.msra.mxu0 0.0
        %1738 = vmatprep.subr.mxu0 0.0
        %1739 = vmatpush1.msra.mxu0 0.0
        %1740 = vmatprep.subr.mxu0 0.0
        %1741 = vmatpush1.msra.mxu0 0.0
        %1742 = vmatprep.subr.mxu0 0.0
        %1743 = vmatpush1.msra.mxu0 0.0
        %1744 = vmatprep.subr.mxu0 0.0
        %1745 = vmatpush1.msra.mxu0 0.0
        %1746 = vmatprep.subr.mxu0 0.0
        %1747 = vmatpush1.msra.mxu0 0.0
        %1748 = vmatprep.subr.mxu0 0.0
        %1749 = vmatpush1.msra.mxu0 0.0
        %1750 = vmatprep.subr.mxu0 0.0
        %1751 = vmatpush1.msra.mxu0 0.0
        %1752 = vmatprep.subr.mxu0 0.0
        %1753 = vmatpush1.msra.mxu0 0.0
        %1754 = vmatprep.subr.mxu0 0.0
        %1755 = vmatpush1.msra.mxu0 0.0
        %1756 = vmatprep.subr.mxu0 0.0
        %1757 = vmatpush1.msra.mxu0 0.0
        %1758 = vmatprep.subr.mxu0 0.0
        %1759 = vmatpush1.msra.mxu0 0.0
        %1760 = vmatprep.subr.mxu0 0.0
        %1761 = vmatpush1.msra.mxu0 0.0
        %1762 = vmatprep.subr.mxu0 0.0
        %1763 = vmatpush1.msra.mxu0 0.0
        %1764 = vmatprep.subr.mxu0 0.0
        %1765 = vmatpush1.msra.mxu0 0.0
        %1766 = vmatprep.subr.mxu0 0.0
        %1767 = vmatpush1.msra.mxu0 0.0
        %1768 = vmatprep.subr.mxu0 0.0
        %1769 = vmatpush1.msra.mxu0 0.0
        %1770 = vmatprep.mubr.f32.mxu0 0.0
        %1771 = vmatmul.mubr.f32.gmra.mrb[0].mxu0 %v1702
        %v1772 = vpop.f32.mrb[0].mxu0
        %v1773 = vadd.f32 0.0, %v1772
        %v1774 = vpop.f32.mrb[0].mxu0
        %1775 = vdwg.mxu0
        %v1776 = vadd.f32 %v1694, %v1773
        %v1777 = vld [vmem:[%s10] sm:$0xf]
        %1779 = vset.pattern.permute.xlu0 0
        %1780 = vperm.xlu0 %1779, %v1777
        %v1781 = vpop.permute.xlu0 %1780
        %v1783 = vadd.f32 %v1776, %v1781
        %vm1784 = vcmp.gt.f32.partialorder %v1783, 0.0
        %v1785 = vmul.f32 %v1783, 0.1
        %v1786 = vsel %vm1784, %v1783, %v1785
        %s1787 = sadd.s32 %s489, 4294967291
        %v1788 = vstv %s1787
        %v1789 = vadd.s32 %v1788, %v492
        %vm1790 = vcmp.ge.s32.totalorder %v1789, 0
        %vm1791 = vcmp.lt.s32.totalorder %v1789, 16
        %vm1792 = vmand %vm1790, %vm1791
        %v1793 = vsel %vm1792, 1, 0
        %vm1794 = vcmp.eq.s32.totalorder %v1793, 1
        %v1795 = vsel %vm1794, %v1786, 0.0
        %v1796 = vld [vmem:[#allocation5] sm:$0xf]
        %s1797 = scalar_lea.vmem [#allocation5], 4
        %v1798 = vld [vmem:[%s1797] sm:$0xf]
        %1800 = vrot.lane.b32.xlu0 %v1795, 123
        %v1801 = vpop.permute.xlu0 %1800
        %v1803 = vsel %vm507, %v1798, 0
        %v1805 = vsel %vm511, %v1801, 0
        %1807 = vmatprep.subr.mxu0 0.0
        %1808 = vmatpush1.msra.mxu0 %v1805
        %1809 = vmatprep.subr.mxu0 0.0
        %1810 = vmatpush1.msra.mxu0 0.0
        %1811 = vmatprep.subr.mxu0 0.0
        %1812 = vmatpush1.msra.mxu0 0.0
        %1813 = vmatprep.subr.mxu0 0.0
        %1814 = vmatpush1.msra.mxu0 0.0
        %1815 = vmatprep.subr.mxu0 0.0
        %1816 = vmatpush1.msra.mxu0 0.0
        %1817 = vmatprep.subr.mxu0 0.0
        %1818 = vmatpush1.msra.mxu0 0.0
        %1819 = vmatprep.subr.mxu0 0.0
        %1820 = vmatpush1.msra.mxu0 0.0
        %1821 = vmatprep.subr.mxu0 0.0
        %1822 = vmatpush1.msra.mxu0 0.0
        %1823 = vmatprep.subr.mxu0 0.0
        %1824 = vmatpush1.msra.mxu0 0.0
        %1825 = vmatprep.subr.mxu0 0.0
        %1826 = vmatpush1.msra.mxu0 0.0
        %1827 = vmatprep.subr.mxu0 0.0
        %1828 = vmatpush1.msra.mxu0 0.0
        %1829 = vmatprep.subr.mxu0 0.0
        %1830 = vmatpush1.msra.mxu0 0.0
        %1831 = vmatprep.subr.mxu0 0.0
        %1832 = vmatpush1.msra.mxu0 0.0
        %1833 = vmatprep.subr.mxu0 0.0
        %1834 = vmatpush1.msra.mxu0 0.0
        %1835 = vmatprep.subr.mxu0 0.0
        %1836 = vmatpush1.msra.mxu0 0.0
        %1837 = vmatprep.subr.mxu0 0.0
        %1838 = vmatpush1.msra.mxu0 0.0
        %1839 = vmatprep.subr.mxu0 0.0
        %1840 = vmatpush1.msra.mxu0 0.0
        %1841 = vmatprep.subr.mxu0 0.0
        %1842 = vmatpush1.msra.mxu0 0.0
        %1843 = vmatprep.subr.mxu0 0.0
        %1844 = vmatpush1.msra.mxu0 0.0
        %1845 = vmatprep.subr.mxu0 0.0
        %1846 = vmatpush1.msra.mxu0 0.0
        %1847 = vmatprep.subr.mxu0 0.0
        %1848 = vmatpush1.msra.mxu0 0.0
        %1849 = vmatprep.subr.mxu0 0.0
        %1850 = vmatpush1.msra.mxu0 0.0
        %1851 = vmatprep.subr.mxu0 0.0
        %1852 = vmatpush1.msra.mxu0 0.0
        %1853 = vmatprep.subr.mxu0 0.0
        %1854 = vmatpush1.msra.mxu0 0.0
        %1855 = vmatprep.subr.mxu0 0.0
        %1856 = vmatpush1.msra.mxu0 0.0
        %1857 = vmatprep.subr.mxu0 0.0
        %1858 = vmatpush1.msra.mxu0 0.0
        %1859 = vmatprep.subr.mxu0 0.0
        %1860 = vmatpush1.msra.mxu0 0.0
        %1861 = vmatprep.subr.mxu0 0.0
        %1862 = vmatpush1.msra.mxu0 0.0
        %1863 = vmatprep.subr.mxu0 0.0
        %1864 = vmatpush1.msra.mxu0 0.0
        %1865 = vmatprep.subr.mxu0 0.0
        %1866 = vmatpush1.msra.mxu0 0.0
        %1867 = vmatprep.subr.mxu0 0.0
        %1868 = vmatpush1.msra.mxu0 0.0
        %1869 = vmatprep.subr.mxu0 0.0
        %1870 = vmatpush1.msra.mxu0 0.0
        %1871 = vmatprep.mubr.f32.mxu0 0.0
        %1872 = vmatmul.mubr.f32.gmra.mrb[0].mxu0 %v1803
        %v1873 = vpop.f32.mrb[0].mxu0
        %v1874 = vadd.f32 0.0, %v1873
        %v1875 = vpop.f32.mrb[0].mxu0
        %1876 = vdwg.mxu0
        %v1878 = vsel %vm507, %v1796, 0
        %v1880 = vsel %vm511, %v1795, 0
        %1882 = vmatprep.subr.mxu0 0.0
        %1883 = vmatpush1.msra.mxu0 %v1880
        %1884 = vmatprep.subr.mxu0 0.0
        %1885 = vmatpush1.msra.mxu0 0.0
        %1886 = vmatprep.subr.mxu0 0.0
        %1887 = vmatpush1.msra.mxu0 0.0
        %1888 = vmatprep.subr.mxu0 0.0
        %1889 = vmatpush1.msra.mxu0 0.0
        %1890 = vmatprep.subr.mxu0 0.0
        %1891 = vmatpush1.msra.mxu0 0.0
        %1892 = vmatprep.subr.mxu0 0.0
        %1893 = vmatpush1.msra.mxu0 0.0
        %1894 = vmatprep.subr.mxu0 0.0
        %1895 = vmatpush1.msra.mxu0 0.0
        %1896 = vmatprep.subr.mxu0 0.0
        %1897 = vmatpush1.msra.mxu0 0.0
        %1898 = vmatprep.subr.mxu0 0.0
        %1899 = vmatpush1.msra.mxu0 0.0
        %1900 = vmatprep.subr.mxu0 0.0
        %1901 = vmatpush1.msra.mxu0 0.0
        %1902 = vmatprep.subr.mxu0 0.0
        %1903 = vmatpush1.msra.mxu0 0.0
        %1904 = vmatprep.subr.mxu0 0.0
        %1905 = vmatpush1.msra.mxu0 0.0
        %1906 = vmatprep.subr.mxu0 0.0
        %1907 = vmatpush1.msra.mxu0 0.0
        %1908 = vmatprep.subr.mxu0 0.0
        %1909 = vmatpush1.msra.mxu0 0.0
        %1910 = vmatprep.subr.mxu0 0.0
        %1911 = vmatpush1.msra.mxu0 0.0
        %1912 = vmatprep.subr.mxu0 0.0
        %1913 = vmatpush1.msra.mxu0 0.0
        %1914 = vmatprep.subr.mxu0 0.0
        %1915 = vmatpush1.msra.mxu0 0.0
        %1916 = vmatprep.subr.mxu0 0.0
        %1917 = vmatpush1.msra.mxu0 0.0
        %1918 = vmatprep.subr.mxu0 0.0
        %1919 = vmatpush1.msra.mxu0 0.0
        %1920 = vmatprep.subr.mxu0 0.0
        %1921 = vmatpush1.msra.mxu0 0.0
        %1922 = vmatprep.subr.mxu0 0.0
        %1923 = vmatpush1.msra.mxu0 0.0
        %1924 = vmatprep.subr.mxu0 0.0
        %1925 = vmatpush1.msra.mxu0 0.0
        %1926 = vmatprep.subr.mxu0 0.0
        %1927 = vmatpush1.msra.mxu0 0.0
        %1928 = vmatprep.subr.mxu0 0.0
        %1929 = vmatpush1.msra.mxu0 0.0
        %1930 = vmatprep.subr.mxu0 0.0
        %1931 = vmatpush1.msra.mxu0 0.0
        %1932 = vmatprep.subr.mxu0 0.0
        %1933 = vmatpush1.msra.mxu0 0.0
        %1934 = vmatprep.subr.mxu0 0.0
        %1935 = vmatpush1.msra.mxu0 0.0
        %1936 = vmatprep.subr.mxu0 0.0
        %1937 = vmatpush1.msra.mxu0 0.0
        %1938 = vmatprep.subr.mxu0 0.0
        %1939 = vmatpush1.msra.mxu0 0.0
        %1940 = vmatprep.subr.mxu0 0.0
        %1941 = vmatpush1.msra.mxu0 0.0
        %1942 = vmatprep.subr.mxu0 0.0
        %1943 = vmatpush1.msra.mxu0 0.0
        %1944 = vmatprep.subr.mxu0 0.0
        %1945 = vmatpush1.msra.mxu0 0.0
        %1946 = vmatprep.mubr.f32.mxu0 0.0
        %1947 = vmatmul.mubr.f32.gmra.mrb[0].mxu0 %v1878
        %v1948 = vpop.f32.mrb[0].mxu0
        %v1949 = vadd.f32 %v1874, %v1948
        %v1950 = vpop.f32.mrb[0].mxu0
        %1951 = vdwg.mxu0
        %s1952 = scalar_lea.vmem [#allocation5], 8
        %v1953 = vld [vmem:[%s1952] sm:$0xf]
        %1954 = vrot.lane.b32.xlu0 %v1795, 118
        %v1955 = vpop.permute.xlu0 %1954
        %v1957 = vsel %vm507, %v1953, 0
        %v1959 = vsel %vm511, %v1955, 0
        %1961 = vmatprep.subr.mxu0 0.0
        %1962 = vmatpush1.msra.mxu0 %v1959
        %1963 = vmatprep.subr.mxu0 0.0
        %1964 = vmatpush1.msra.mxu0 0.0
        %1965 = vmatprep.subr.mxu0 0.0
        %1966 = vmatpush1.msra.mxu0 0.0
        %1967 = vmatprep.subr.mxu0 0.0
        %1968 = vmatpush1.msra.mxu0 0.0
        %1969 = vmatprep.subr.mxu0 0.0
        %1970 = vmatpush1.msra.mxu0 0.0
        %1971 = vmatprep.subr.mxu0 0.0
        %1972 = vmatpush1.msra.mxu0 0.0
        %1973 = vmatprep.subr.mxu0 0.0
        %1974 = vmatpush1.msra.mxu0 0.0
        %1975 = vmatprep.subr.mxu0 0.0
        %1976 = vmatpush1.msra.mxu0 0.0
        %1977 = vmatprep.subr.mxu0 0.0
        %1978 = vmatpush1.msra.mxu0 0.0
        %1979 = vmatprep.subr.mxu0 0.0
        %1980 = vmatpush1.msra.mxu0 0.0
        %1981 = vmatprep.subr.mxu0 0.0
        %1982 = vmatpush1.msra.mxu0 0.0
        %1983 = vmatprep.subr.mxu0 0.0
        %1984 = vmatpush1.msra.mxu0 0.0
        %1985 = vmatprep.subr.mxu0 0.0
        %1986 = vmatpush1.msra.mxu0 0.0
        %1987 = vmatprep.subr.mxu0 0.0
        %1988 = vmatpush1.msra.mxu0 0.0
        %1989 = vmatprep.subr.mxu0 0.0
        %1990 = vmatpush1.msra.mxu0 0.0
        %1991 = vmatprep.subr.mxu0 0.0
        %1992 = vmatpush1.msra.mxu0 0.0
        %1993 = vmatprep.subr.mxu0 0.0
        %1994 = vmatpush1.msra.mxu0 0.0
        %1995 = vmatprep.subr.mxu0 0.0
        %1996 = vmatpush1.msra.mxu0 0.0
        %1997 = vmatprep.subr.mxu0 0.0
        %1998 = vmatpush1.msra.mxu0 0.0
        %1999 = vmatprep.subr.mxu0 0.0
        %2000 = vmatpush1.msra.mxu0 0.0
        %2001 = vmatprep.subr.mxu0 0.0
        %2002 = vmatpush1.msra.mxu0 0.0
        %2003 = vmatprep.subr.mxu0 0.0
        %2004 = vmatpush1.msra.mxu0 0.0
        %2005 = vmatprep.subr.mxu0 0.0
        %2006 = vmatpush1.msra.mxu0 0.0
        %2007 = vmatprep.subr.mxu0 0.0
        %2008 = vmatpush1.msra.mxu0 0.0
        %2009 = vmatprep.subr.mxu0 0.0
        %2010 = vmatpush1.msra.mxu0 0.0
        %2011 = vmatprep.subr.mxu0 0.0
        %2012 = vmatpush1.msra.mxu0 0.0
        %2013 = vmatprep.subr.mxu0 0.0
        %2014 = vmatpush1.msra.mxu0 0.0
        %2015 = vmatprep.subr.mxu0 0.0
        %2016 = vmatpush1.msra.mxu0 0.0
        %2017 = vmatprep.subr.mxu0 0.0
        %2018 = vmatpush1.msra.mxu0 0.0
        %2019 = vmatprep.subr.mxu0 0.0
        %2020 = vmatpush1.msra.mxu0 0.0
        %2021 = vmatprep.subr.mxu0 0.0
        %2022 = vmatpush1.msra.mxu0 0.0
        %2023 = vmatprep.subr.mxu0 0.0
        %2024 = vmatpush1.msra.mxu0 0.0
        %2025 = vmatprep.mubr.f32.mxu0 0.0
        %2026 = vmatmul.mubr.f32.gmra.mrb[0].mxu0 %v1957
        %v2027 = vpop.f32.mrb[0].mxu0
        %v2028 = vadd.f32 0.0, %v2027
        %v2029 = vpop.f32.mrb[0].mxu0
        %2030 = vdwg.mxu0
        %v2031 = vadd.f32 %v1949, %v2028
        %v2032 = vld [vmem:[%s12] sm:$0xf]
        %2034 = vset.pattern.permute.xlu0 0
        %2035 = vperm.xlu0 %2034, %v2032
        %v2036 = vpop.permute.xlu0 %2035
        %v2038 = vadd.f32 %v2031, %v2036
        %vm2039 = vcmp.gt.f32.partialorder %v2038, 0.0
        %v2040 = vmul.f32 %v2038, 0.1
        %v2041 = vsel %vm2039, %v2038, %v2040
        %2043 = vrot.lane.b32.xlu0 %v2041, 18
        %v2044 = vpop.permute.xlu0 %2043
        %v2046 = vadd.f32 %v1527, %v2044
        %2048 = vrot.lane.b32.xlu0 %v2046, 110
        %v2049 = vpop.permute.xlu0 %2048
        %vm2051 = vcmask 125952
        %2052 = vst.msk [vmem:[%s487] sm:$0xf] %vm2051, %v2049
        %s2053 = sand.u32 %s333, 1
        %s2054 = scalar_lea.sflag [#allocation4], %s2053
        %s2055 = sand.u32 %s333, 1
        %s2056 = smul.addr %s2055, 4
        %s2057 = scalar_lea.vmem [#allocation7], %s2056
        // Predicated region
        $region81: #{tpu_custom_call.1} parent=71 // pred_check
          %p2058 = pneg %p343
        $region82: #{tpu_custom_call.1} parent=71 // pred_check_branch
          %2060 = sbr.rel (%p2058) target = $region84
        $region83: #{tpu_custom_call.1} parent=71 // pred_region
          %s2062 = ssub.s32 64, 64
          %2063 = vsyncadd %s2054, %s2062
          %s2064 = sadd.s32 %s36, %s35
          %s2065 = smul.addr %s2064, 64
          %s2066 = scalar_lea.hbm %s13, %s2065
          %s2068 = sshll.u32 %s2057, 4
          %s2069 = int_to_ptr.vmem [resolvable:$true] %s2068
          %2071 = dma.vmem_to_hbm [thread:$0]  %s2069, 64, %s2066, %s2054
        $region84: #{tpu_custom_call.1} parent=71 // pred_fallthru
          _
      $region72: #{tpu_custom_call.1} parent=5 // pred_fallthru
        _
      %p2072 = scmp.le.s32.totalorder 2, %s26
      // Predicated region
      $region85: #{tpu_custom_call.1} parent=5 // pred_check
        %p2073 = pneg %p2072
      $region86: #{tpu_custom_call.1} parent=5 // pred_check_branch
        %2075 = sbr.rel (%p2073) target = $region88
      $region87: #{tpu_custom_call.1} parent=5 // pred_region
        %s2076 = ssub.s32 %s26, 2
        // Predicated region
        $region89: #{tpu_custom_call.1} parent=87 // pred_check
          %p2077 = pneg %p349
        $region90: #{tpu_custom_call.1} parent=87 // pred_check_branch
          %2079 = sbr.rel (%p2077) target = $region92
        $region91: #{tpu_custom_call.1} parent=87 // pred_region
          %s2080 = sand.u32 %s334, 1
          %s2081 = scalar_lea.sflag [#allocation4], %s2080
          %s2082 = sand.u32 %s334, 1
          %s2083 = smul.addr %s2082, 4
          %s2084 = scalar_lea.vmem [#allocation7], %s2083
          %2085 = dma.done %s2081, 64
        $region92: #{tpu_custom_call.1} parent=87 // pred_fallthru
          _
      $region88: #{tpu_custom_call.1} parent=5 // pred_fallthru
        _
    $region6: #{tpu_custom_call.1} parent=1 // loop_footer
      %s30 = sadd.s32 1, %s26
    $region7: #{tpu_custom_call.1} parent=1 // loop_footer_branch
      %25 = sbr.rel target = $region3
    $region8: #{tpu_custom_call.1} parent=1 // loop_exit
      _
    %2086 = vsyncpa [#allocation3], 1
    %s2087 = scalar_lea.sflag [#allocation3], 1
    %2088 = vsyncpa %s2087, 1
    %2089 = vsyncpa [#allocation6], 1
    %2090 = vsyncpa [#allocation4], 1
    %s2091 = scalar_lea.sflag [#allocation4], 1
    %2092 = vsyncpa %s2091, 1

</llo_original>
